<compile_context>
chip_gen: v6e
topology: v6e:2x2x1
jax: 0.10.0
libtpu: 0.0.40
codegen_flags: <defaults>
</compile_context>

<pallas_src>
import functools

import jax
import jax.numpy as jnp
from jax.experimental import pallas as pl
from jax.experimental.pallas import tpu as pltpu

_HIDDEN = 25
_N_CONV = 5  # number of GCNConv layers; +1 linear classifier


def _round_up(v, m):
    return ((v + m - 1) // m) * m


# ----------------------------- Pallas kernel ------------------------------- #
def _gcn_kernel(a_ref, x_ref, w_ref, b_ref, out_ref):
    A = a_ref[...]            # [Np, Np]  normalized adjacency (zero padded)
    h = x_ref[...]            # [Np, P]   node features (zero padded)

    # 5x GCNConv: relu(A_hat @ (H @ W_i) + b_i)  -- static Python unroll,
    # weights indexed statically out of the stacked [6, P, P] operand.
    for i in range(_N_CONV):
        xw = jnp.dot(h, w_ref[i], preferred_element_type=jnp.float32)   # [Np, P]
        agg = jnp.dot(A, xw, preferred_element_type=jnp.float32)        # [Np, P]
        h = jnp.maximum(agg + b_ref[i], 0.0)

    # Linear classifier
    out_ref[...] = (
        jnp.dot(h, w_ref[_N_CONV], preferred_element_type=jnp.float32)
        + b_ref[_N_CONV]
    )


def _full_spec(shape):
    return pl.BlockSpec(shape, lambda i: tuple(0 for _ in shape))


@functools.partial(jax.jit, static_argnames=("d",))
def gcn_forward_pallas(a_hat, x, w_stack, b_stack, *, d):
    """a_hat: [N,N] normalized adjacency; x: [N,d]; (w_stack,b_stack) from pack_params."""
    n = x.shape[0]
    p = w_stack.shape[-1]                      # padded feature/hidden dim (128)
    n_pad = max(128, _round_up(n, 128))        # lane-dense adjacency & rows

    # zero padding is semantically neutral: padded A rows/cols are zero, padded
    # weight rows/cols are zero, so real-node outputs are untouched.
    a_p = jnp.zeros((n_pad, n_pad), jnp.float32).at[:n, :n].set(a_hat)
    x_p = jnp.zeros((n_pad, p), jnp.float32).at[:n, : x.shape[1]].set(x)

    operands = (a_p, x_p, w_stack, b_stack)
    out_p = pl.pallas_call(
        _gcn_kernel,
        out_shape=jax.ShapeDtypeStruct((n_pad, p), jnp.float32),
        grid=(1,),
        in_specs=[_full_spec(op.shape) for op in operands],
        out_specs=_full_spec((n_pad, p)),
        compiler_params=pltpu.CompilerParams(
            dimension_semantics=("arbitrary",)),
    )(*operands)

    return out_p[:n, :d]


def pack_params(params):
    """Pad + stack all layer weights/biases ONCE (done outside the hot path)."""
    d = params["w1"].shape[0]
    hidden = params["w1"].shape[1]
    p = max(128, _round_up(max(d, hidden), 128))

    def padw(a):
        return jnp.zeros((p, p), jnp.float32).at[: a.shape[0], : a.shape[1]].set(a)

    def padb(a):
        return jnp.zeros((1, p), jnp.float32).at[0, : a.shape[0]].set(a)

    ws = [params[k] for k in ("w1", "w2", "w3", "w4", "w5", "wc")]
    bs = [params[k] for k in ("b1", "b2", "b3", "b4", "b5", "bc")]
    w_stack = jnp.stack([padw(w) for w in ws])   # [6, P, P]
    b_stack = jnp.stack([padb(b) for b in bs])   # [6, 1, P]
    return w_stack, b_stack


# ------------------------------- glue (JAX) -------------------------------- #
def normalized_adjacency(edge_index, num_nodes):
    """Dense D^-1/2 (A + I) D^-1/2 matching PyG GCNConv's gcn_norm."""
    src, dst = edge_index[0], edge_index[1]
    loops = jnp.arange(num_nodes, dtype=edge_index.dtype)
    src = jnp.concatenate([src, loops])
    dst = jnp.concatenate([dst, loops])
    adj = jnp.zeros((num_nodes, num_nodes), jnp.float32).at[dst, src].add(1.0)
    deg = adj.sum(axis=1)                      # degree incl. self-loop
    dinv = jnp.where(deg > 0, jax.lax.rsqrt(deg), 0.0)
    return dinv[:, None] * adj * dinv[None, :]


def init_params(key, d, hidden=_HIDDEN):
    ks = jax.random.split(key, 12)
    p = {}
    p["w1"] = 0.1 * jax.random.normal(ks[0], (d, hidden), jnp.float32)
    p["b1"] = 0.1 * jax.random.normal(ks[1], (hidden,), jnp.float32)
    for i, layer in enumerate(["w2", "w3", "w4", "w5"]):
        p[layer] = 0.1 * jax.random.normal(ks[2 + 2 * i], (hidden, hidden), jnp.float32)
        p["b" + layer[1]] = 0.1 * jax.random.normal(ks[3 + 2 * i], (hidden,), jnp.float32)
    p["wc"] = 0.1 * jax.random.normal(ks[10], (hidden, d), jnp.float32)
    p["bc"] = 0.1 * jax.random.normal(ks[11], (d,), jnp.float32)
    return p


def gcn_forward_ref(a_hat, x, p):
    h = x
    for i in range(1, 6):
        h = jnp.maximum(a_hat @ (h @ p[f"w{i}"]) + p[f"b{i}"], 0.0)
    return h @ p["wc"] + p["bc"]


if __name__ == "__main__":
    N, D = 16, 4                      # 16 nodes, input/output feature dim d=4
    key = jax.random.PRNGKey(0)
    k_x, k_p = jax.random.split(key)

    # node features [N, d]
    x = jax.random.normal(k_x, (N, D), jnp.float32)

    # deterministic undirected ring graph: edge_index [2, 2N]
    src = jnp.arange(N, dtype=jnp.int32)
    dst = (src + 1) % N
    edge_index = jnp.stack(
        [jnp.concatenate([src, dst]), jnp.concatenate([dst, src])], axis=0
    )

    params = init_params(k_p, D)
    a_hat = normalized_adjacency(edge_index, N)
    w_stack, b_stack = pack_params(params)     # one-time padding/stacking

    out = gcn_forward_pallas(a_hat, x, w_stack, b_stack, d=D)
    out = jax.block_until_ready(out)

    ref = gcn_forward_ref(a_hat, x, params)
    if not jnp.allclose(out, ref, atol=1e-4, rtol=1e-4):
        raise AssertionError("Pallas GCN output mismatch vs JAX reference")

    print("KERNEL_OK")
</pallas_src>

<mosaic_0001>
module attributes {stable_mosaic.version = 11 : i64} {
  func.func @_gcn_kernel(%arg0: i32, %arg1: memref<128x128xf32, #tpu.memory_space<vmem>>, %arg2: memref<128x128xf32, #tpu.memory_space<vmem>>, %arg3: memref<6x128x128xf32, #tpu.memory_space<vmem>>, %arg4: memref<6x1x128xf32, #tpu.memory_space<vmem>>, %arg5: memref<128x128xf32, #tpu.memory_space<vmem>>) attributes {dimension_semantics = [#tpu.dimension_semantics<arbitrary>], iteration_bounds = array<i64: 1>, scalar_prefetch = 0 : i64, scratch_operands = 0 : i64, tpu.core_type = #tpu.core_type<tc>, window_params = [{pipeline_mode = #tpu.pipeline_mode<synchronous>, transform_indices = @transform_0, window_bounds = array<i64: 128, 128>}, {pipeline_mode = #tpu.pipeline_mode<synchronous>, transform_indices = @transform_1, window_bounds = array<i64: 128, 128>}, {pipeline_mode = #tpu.pipeline_mode<synchronous>, transform_indices = @transform_2, window_bounds = array<i64: 6, 128, 128>}, {pipeline_mode = #tpu.pipeline_mode<synchronous>, transform_indices = @transform_3, window_bounds = array<i64: 6, 1, 128>}, {pipeline_mode = #tpu.pipeline_mode<synchronous>, transform_indices = @transform_4, window_bounds = array<i64: 128, 128>}]} {
    %c0 = arith.constant 0 : index
    %c0_0 = arith.constant 0 : index
    %0 = vector.load %arg1[%c0, %c0_0] : memref<128x128xf32, #tpu.memory_space<vmem>>, vector<128x128xf32>
    %c0_1 = arith.constant 0 : index
    %c0_2 = arith.constant 0 : index
    %1 = vector.load %arg2[%c0_1, %c0_2] : memref<128x128xf32, #tpu.memory_space<vmem>>, vector<128x128xf32>
    %c0_3 = arith.constant 0 : index
    %c0_4 = arith.constant 0 : index
    %c0_5 = arith.constant 0 : index
    %2 = vector.load %arg3[%c0_3, %c0_4, %c0_5] : memref<6x128x128xf32, #tpu.memory_space<vmem>>, vector<1x128x128xf32>
    %3 = vector.shape_cast %2 : vector<1x128x128xf32> to vector<128x128xf32>
    %cst = arith.constant dense<0.000000e+00> : vector<128x128xf32>
    %4 = tpu.matmul %1, %3, %cst {dimension_numbers = #tpu.dot_dimension_numbers<[1], [0], [0], [1], [0, 0, 1, 1], [], []>} : vector<128x128xf32>, vector<128x128xf32>, vector<128x128xf32> -> vector<128x128xf32>
    %cst_6 = arith.constant dense<0.000000e+00> : vector<128x128xf32>
    %5 = tpu.matmul %0, %4, %cst_6 {dimension_numbers = #tpu.dot_dimension_numbers<[1], [0], [0], [1], [0, 0, 1, 1], [], []>} : vector<128x128xf32>, vector<128x128xf32>, vector<128x128xf32> -> vector<128x128xf32>
    %c0_7 = arith.constant 0 : index
    %c0_8 = arith.constant 0 : index
    %c0_9 = arith.constant 0 : index
    %6 = vector.load %arg4[%c0_7, %c0_8, %c0_9] : memref<6x1x128xf32, #tpu.memory_space<vmem>>, vector<1x1x128xf32>
    %7 = vector.shape_cast %6 : vector<1x1x128xf32> to vector<1x128xf32>
    %8 = vector.broadcast %7 : vector<1x128xf32> to vector<128x128xf32>
    %9 = arith.addf %5, %8 : vector<128x128xf32>
    %cst_10 = arith.constant 0.000000e+00 : f32
    %10 = vector.broadcast %cst_10 : f32 to vector<128x128xf32>
    %11 = arith.maximumf %9, %10 : vector<128x128xf32>
    %c1 = arith.constant 1 : index
    %c0_11 = arith.constant 0 : index
    %c0_12 = arith.constant 0 : index
    %12 = vector.load %arg3[%c1, %c0_11, %c0_12] : memref<6x128x128xf32, #tpu.memory_space<vmem>>, vector<1x128x128xf32>
    %13 = vector.shape_cast %12 : vector<1x128x128xf32> to vector<128x128xf32>
    %cst_13 = arith.constant dense<0.000000e+00> : vector<128x128xf32>
    %14 = tpu.matmul %11, %13, %cst_13 {dimension_numbers = #tpu.dot_dimension_numbers<[1], [0], [0], [1], [0, 0, 1, 1], [], []>} : vector<128x128xf32>, vector<128x128xf32>, vector<128x128xf32> -> vector<128x128xf32>
    %cst_14 = arith.constant dense<0.000000e+00> : vector<128x128xf32>
    %15 = tpu.matmul %0, %14, %cst_14 {dimension_numbers = #tpu.dot_dimension_numbers<[1], [0], [0], [1], [0, 0, 1, 1], [], []>} : vector<128x128xf32>, vector<128x128xf32>, vector<128x128xf32> -> vector<128x128xf32>
    %c1_15 = arith.constant 1 : index
    %c0_16 = arith.constant 0 : index
    %c0_17 = arith.constant 0 : index
    %16 = vector.load %arg4[%c1_15, %c0_16, %c0_17] : memref<6x1x128xf32, #tpu.memory_space<vmem>>, vector<1x1x128xf32>
    %17 = vector.shape_cast %16 : vector<1x1x128xf32> to vector<1x128xf32>
    %18 = vector.broadcast %17 : vector<1x128xf32> to vector<128x128xf32>
    %19 = arith.addf %15, %18 : vector<128x128xf32>
    %cst_18 = arith.constant 0.000000e+00 : f32
    %20 = vector.broadcast %cst_18 : f32 to vector<128x128xf32>
    %21 = arith.maximumf %19, %20 : vector<128x128xf32>
    %c2 = arith.constant 2 : index
    %c0_19 = arith.constant 0 : index
    %c0_20 = arith.constant 0 : index
    %22 = vector.load %arg3[%c2, %c0_19, %c0_20] : memref<6x128x128xf32, #tpu.memory_space<vmem>>, vector<1x128x128xf32>
    %23 = vector.shape_cast %22 : vector<1x128x128xf32> to vector<128x128xf32>
    %cst_21 = arith.constant dense<0.000000e+00> : vector<128x128xf32>
    %24 = tpu.matmul %21, %23, %cst_21 {dimension_numbers = #tpu.dot_dimension_numbers<[1], [0], [0], [1], [0, 0, 1, 1], [], []>} : vector<128x128xf32>, vector<128x128xf32>, vector<128x128xf32> -> vector<128x128xf32>
    %cst_22 = arith.constant dense<0.000000e+00> : vector<128x128xf32>
    %25 = tpu.matmul %0, %24, %cst_22 {dimension_numbers = #tpu.dot_dimension_numbers<[1], [0], [0], [1], [0, 0, 1, 1], [], []>} : vector<128x128xf32>, vector<128x128xf32>, vector<128x128xf32> -> vector<128x128xf32>
    %c2_23 = arith.constant 2 : index
    %c0_24 = arith.constant 0 : index
    %c0_25 = arith.constant 0 : index
    %26 = vector.load %arg4[%c2_23, %c0_24, %c0_25] : memref<6x1x128xf32, #tpu.memory_space<vmem>>, vector<1x1x128xf32>
    %27 = vector.shape_cast %26 : vector<1x1x128xf32> to vector<1x128xf32>
    %28 = vector.broadcast %27 : vector<1x128xf32> to vector<128x128xf32>
    %29 = arith.addf %25, %28 : vector<128x128xf32>
    %cst_26 = arith.constant 0.000000e+00 : f32
    %30 = vector.broadcast %cst_26 : f32 to vector<128x128xf32>
    %31 = arith.maximumf %29, %30 : vector<128x128xf32>
    %c3 = arith.constant 3 : index
    %c0_27 = arith.constant 0 : index
    %c0_28 = arith.constant 0 : index
    %32 = vector.load %arg3[%c3, %c0_27, %c0_28] : memref<6x128x128xf32, #tpu.memory_space<vmem>>, vector<1x128x128xf32>
    %33 = vector.shape_cast %32 : vector<1x128x128xf32> to vector<128x128xf32>
    %cst_29 = arith.constant dense<0.000000e+00> : vector<128x128xf32>
    %34 = tpu.matmul %31, %33, %cst_29 {dimension_numbers = #tpu.dot_dimension_numbers<[1], [0], [0], [1], [0, 0, 1, 1], [], []>} : vector<128x128xf32>, vector<128x128xf32>, vector<128x128xf32> -> vector<128x128xf32>
    %cst_30 = arith.constant dense<0.000000e+00> : vector<128x128xf32>
    %35 = tpu.matmul %0, %34, %cst_30 {dimension_numbers = #tpu.dot_dimension_numbers<[1], [0], [0], [1], [0, 0, 1, 1], [], []>} : vector<128x128xf32>, vector<128x128xf32>, vector<128x128xf32> -> vector<128x128xf32>
    %c3_31 = arith.constant 3 : index
    %c0_32 = arith.constant 0 : index
    %c0_33 = arith.constant 0 : index
    %36 = vector.load %arg4[%c3_31, %c0_32, %c0_33] : memref<6x1x128xf32, #tpu.memory_space<vmem>>, vector<1x1x128xf32>
    %37 = vector.shape_cast %36 : vector<1x1x128xf32> to vector<1x128xf32>
    %38 = vector.broadcast %37 : vector<1x128xf32> to vector<128x128xf32>
    %39 = arith.addf %35, %38 : vector<128x128xf32>
    %cst_34 = arith.constant 0.000000e+00 : f32
    %40 = vector.broadcast %cst_34 : f32 to vector<128x128xf32>
    %41 = arith.maximumf %39, %40 : vector<128x128xf32>
    %c4 = arith.constant 4 : index
    %c0_35 = arith.constant 0 : index
    %c0_36 = arith.constant 0 : index
    %42 = vector.load %arg3[%c4, %c0_35, %c0_36] : memref<6x128x128xf32, #tpu.memory_space<vmem>>, vector<1x128x128xf32>
    %43 = vector.shape_cast %42 : vector<1x128x128xf32> to vector<128x128xf32>
    %cst_37 = arith.constant dense<0.000000e+00> : vector<128x128xf32>
    %44 = tpu.matmul %41, %43, %cst_37 {dimension_numbers = #tpu.dot_dimension_numbers<[1], [0], [0], [1], [0, 0, 1, 1], [], []>} : vector<128x128xf32>, vector<128x128xf32>, vector<128x128xf32> -> vector<128x128xf32>
    %cst_38 = arith.constant dense<0.000000e+00> : vector<128x128xf32>
    %45 = tpu.matmul %0, %44, %cst_38 {dimension_numbers = #tpu.dot_dimension_numbers<[1], [0], [0], [1], [0, 0, 1, 1], [], []>} : vector<128x128xf32>, vector<128x128xf32>, vector<128x128xf32> -> vector<128x128xf32>
    %c4_39 = arith.constant 4 : index
    %c0_40 = arith.constant 0 : index
    %c0_41 = arith.constant 0 : index
    %46 = vector.load %arg4[%c4_39, %c0_40, %c0_41] : memref<6x1x128xf32, #tpu.memory_space<vmem>>, vector<1x1x128xf32>
    %47 = vector.shape_cast %46 : vector<1x1x128xf32> to vector<1x128xf32>
    %48 = vector.broadcast %47 : vector<1x128xf32> to vector<128x128xf32>
    %49 = arith.addf %45, %48 : vector<128x128xf32>
    %cst_42 = arith.constant 0.000000e+00 : f32
    %50 = vector.broadcast %cst_42 : f32 to vector<128x128xf32>
    %51 = arith.maximumf %49, %50 : vector<128x128xf32>
    %c5 = arith.constant 5 : index
    %c0_43 = arith.constant 0 : index
    %c0_44 = arith.constant 0 : index
    %52 = vector.load %arg3[%c5, %c0_43, %c0_44] : memref<6x128x128xf32, #tpu.memory_space<vmem>>, vector<1x128x128xf32>
    %53 = vector.shape_cast %52 : vector<1x128x128xf32> to vector<128x128xf32>
    %cst_45 = arith.constant dense<0.000000e+00> : vector<128x128xf32>
    %54 = tpu.matmul %51, %53, %cst_45 {dimension_numbers = #tpu.dot_dimension_numbers<[1], [0], [0], [1], [0, 0, 1, 1], [], []>} : vector<128x128xf32>, vector<128x128xf32>, vector<128x128xf32> -> vector<128x128xf32>
    %c5_46 = arith.constant 5 : index
    %c0_47 = arith.constant 0 : index
    %c0_48 = arith.constant 0 : index
    %55 = vector.load %arg4[%c5_46, %c0_47, %c0_48] : memref<6x1x128xf32, #tpu.memory_space<vmem>>, vector<1x1x128xf32>
    %56 = vector.shape_cast %55 : vector<1x1x128xf32> to vector<1x128xf32>
    %57 = vector.broadcast %56 : vector<1x128xf32> to vector<128x128xf32>
    %58 = arith.addf %54, %57 : vector<128x128xf32>
    %c0_49 = arith.constant 0 : index
    %c0_50 = arith.constant 0 : index
    %59 = vector.load %arg5[%c0_49, %c0_50] : memref<128x128xf32, #tpu.memory_space<vmem>>, vector<128x128xf32>
    tpu.vector_store %arg5[%c0_49, %c0_50], %58 {strides = array<i32>} : memref<128x128xf32, #tpu.memory_space<vmem>>, vector<128x128xf32>,
    return
  }
  func.func @transform_0(%arg0: i32) -> (i32, i32) {
    %c0_i32 = arith.constant 0 : i32
    %c0_i32_0 = arith.constant 0 : i32
    %c0_i32_1 = arith.constant 0 : i32
    return %c0_i32, %c0_i32_0 : i32, i32
  }
  func.func @transform_1(%arg0: i32) -> (i32, i32) {
    %c0_i32 = arith.constant 0 : i32
    %c0_i32_0 = arith.constant 0 : i32
    %c0_i32_1 = arith.constant 0 : i32
    return %c0_i32, %c0_i32_0 : i32, i32
  }
  func.func @transform_2(%arg0: i32) -> (i32, i32, i32) {
    %c0_i32 = arith.constant 0 : i32
    %c0_i32_0 = arith.constant 0 : i32
    %c0_i32_1 = arith.constant 0 : i32
    %c0_i32_2 = arith.constant 0 : i32
    return %c0_i32, %c0_i32_0, %c0_i32_1 : i32, i32, i32
  }
  func.func @transform_3(%arg0: i32) -> (i32, i32, i32) {
    %c0_i32 = arith.constant 0 : i32
    %c0_i32_0 = arith.constant 0 : i32
    %c0_i32_1 = arith.constant 0 : i32
    %c0_i32_2 = arith.constant 0 : i32
    return %c0_i32, %c0_i32_0, %c0_i32_1 : i32, i32, i32
  }
  func.func @transform_4(%arg0: i32) -> (i32, i32) {
    %c0_i32 = arith.constant 0 : i32
    %c0_i32_0 = arith.constant 0 : i32
    %c0_i32_1 = arith.constant 0 : i32
    return %c0_i32, %c0_i32_0 : i32, i32
  }
}

</mosaic_0001>

<llo_original>
// kernel: gcn_forward_pallas.1
$region0: #{gcn_forward_pallas.1}
  #allocation0 [shape = 'u32[]', space=smem, size = 0x4, offset = 0x4, fixed_abs, tag = 'smem constant byte address 0x4 - core index']
  #allocation1 [shape = 'u32[144,128]{1,0:T(1,128)}', space=vmem, size = 0x12000, scoped, tag = 'internal scratch']
  %s0 = inlined_call_operand.vmem [shape: f32[128,128], index: 0, kind: input, shape index: {}]
  %s1 = inlined_call_operand.vmem [shape: f32[128,128], index: 1, kind: input, shape index: {}]
  %s2 = inlined_call_operand.hbm [shape: f32[6,128,128], index: 2, kind: input, shape index: {}]
  %s3 = inlined_call_operand.vmem [shape: f32[6,1,128], index: 3, kind: input, shape index: {}]
  %s4 = inlined_call_operand.vmem [shape: f32[128,128], index: 4, kind: output, shape index: {}]
  %s5 = sld [smem:[#allocation0]]
  $region30: #{gcn_forward_pallas.1} parent=0
    _
  %s7 = ssub.s32 1, %s5
  %s8 = scalar_select 0, %s7, %s5
  $region1: #{gcn_forward_pallas.1} parent=0
    #allocation2 [shape = 'u8[393216]{0}', space=vmem, size = 0x60000, scoped, tag = 'input window, operand 2, single buffered']
    #allocation3 [shape = 's32[1]{0}', space=sflag, size = 0x4, scoped, tag = 'scoped memory for gcn_forward_pallas.1']
    %9 = vsyncpa [#allocation3], 0
    // Predicated region
    $region2: #{gcn_forward_pallas.1} parent=1 // pred_check
      _
    $region3: #{gcn_forward_pallas.1} parent=1 // pred_check_branch
      %11 = sbr.rel (0) target = $region5
    $region4: #{gcn_forward_pallas.1} parent=1 // pred_region
      _
    $region5: #{gcn_forward_pallas.1} parent=1 // pred_fallthru
      _
    // Predicated region
    $region6: #{gcn_forward_pallas.1} parent=1 // pred_check
      _
    $region7: #{gcn_forward_pallas.1} parent=1 // pred_check_branch
      %13 = sbr.rel (0) target = $region9
    $region8: #{gcn_forward_pallas.1} parent=1 // pred_region
      _
    $region9: #{gcn_forward_pallas.1} parent=1 // pred_fallthru
      _
    // Predicated region
    $region10: #{gcn_forward_pallas.1} parent=1 // pred_check
      _
    $region11: #{gcn_forward_pallas.1} parent=1 // pred_check_branch
      %15 = sbr.rel (0) target = $region13
    $region12: #{gcn_forward_pallas.1} parent=1 // pred_region
      %s17 = ssub.s32 12288, 12288
      %18 = vsyncadd [#allocation3], %s17
      %s19 = sshll.u32 [#allocation2], 4
      %s20 = int_to_ptr.vmem [resolvable:$true] %s19
      %25 = dma.hbm_to_vmem [thread:$0]  %s2, 12288, %s20, [#allocation3], 128, 128, 8
    $region13: #{gcn_forward_pallas.1} parent=1 // pred_fallthru
      _
    // Predicated region
    $region14: #{gcn_forward_pallas.1} parent=1 // pred_check
      _
    $region15: #{gcn_forward_pallas.1} parent=1 // pred_check_branch
      %27 = sbr.rel (0) target = $region17
    $region16: #{gcn_forward_pallas.1} parent=1 // pred_region
      _
    $region17: #{gcn_forward_pallas.1} parent=1 // pred_fallthru
      _
    // Predicated region
    $region18: #{gcn_forward_pallas.1} parent=1 // pred_check
      _
    $region19: #{gcn_forward_pallas.1} parent=1 // pred_check_branch
      %29 = sbr.rel (0) target = $region21
    $region20: #{gcn_forward_pallas.1} parent=1 // pred_region
      %30 = dma.done [#allocation3], 12288
    $region21: #{gcn_forward_pallas.1} parent=1 // pred_fallthru
      _
    %v31 = vld [vmem:[%s0] sm:$0xff]
    %v32 = vld [vmem:[%s0 + $0x8] sm:$0xff]
    %v33 = vld [vmem:[%s0 + $0x10] sm:$0xff]
    %v34 = vld [vmem:[%s0 + $0x18] sm:$0xff]
    %v35 = vld [vmem:[%s0 + $0x20] sm:$0xff]
    %v36 = vld [vmem:[%s0 + $0x28] sm:$0xff]
    %v37 = vld [vmem:[%s0 + $0x30] sm:$0xff]
    %v38 = vld [vmem:[%s0 + $0x38] sm:$0xff]
    %v39 = vld [vmem:[%s0 + $0x40] sm:$0xff]
    %v40 = vld [vmem:[%s0 + $0x48] sm:$0xff]
    %v41 = vld [vmem:[%s0 + $0x50] sm:$0xff]
    %v42 = vld [vmem:[%s0 + $0x58] sm:$0xff]
    %v43 = vld [vmem:[%s0 + $0x60] sm:$0xff]
    %v44 = vld [vmem:[%s0 + $0x68] sm:$0xff]
    %v45 = vld [vmem:[%s0 + $0x70] sm:$0xff]
    %v46 = vld [vmem:[%s0 + $0x78] sm:$0xff]
    %v47 = vld [vmem:[%s1] sm:$0xff]
    %v48 = vld [vmem:[%s1 + $0x8] sm:$0xff]
    %v49 = vld [vmem:[%s1 + $0x10] sm:$0xff]
    %v50 = vld [vmem:[%s1 + $0x18] sm:$0xff]
    %v51 = vld [vmem:[%s1 + $0x20] sm:$0xff]
    %v52 = vld [vmem:[%s1 + $0x28] sm:$0xff]
    %v53 = vld [vmem:[%s1 + $0x30] sm:$0xff]
    %v54 = vld [vmem:[%s1 + $0x38] sm:$0xff]
    %v55 = vld [vmem:[%s1 + $0x40] sm:$0xff]
    %v56 = vld [vmem:[%s1 + $0x48] sm:$0xff]
    %v57 = vld [vmem:[%s1 + $0x50] sm:$0xff]
    %v58 = vld [vmem:[%s1 + $0x58] sm:$0xff]
    %v59 = vld [vmem:[%s1 + $0x60] sm:$0xff]
    %v60 = vld [vmem:[%s1 + $0x68] sm:$0xff]
    %v61 = vld [vmem:[%s1 + $0x70] sm:$0xff]
    %v62 = vld [vmem:[%s1 + $0x78] sm:$0xff]
    %v63 = vld [vmem:[#allocation2] sm:$0xff]
    %v64 = vld [vmem:[#allocation2 + $0x8] sm:$0xff]
    %v65 = vld [vmem:[#allocation2 + $0x10] sm:$0xff]
    %v66 = vld [vmem:[#allocation2 + $0x18] sm:$0xff]
    %v67 = vld [vmem:[#allocation2 + $0x20] sm:$0xff]
    %v68 = vld [vmem:[#allocation2 + $0x28] sm:$0xff]
    %v69 = vld [vmem:[#allocation2 + $0x30] sm:$0xff]
    %v70 = vld [vmem:[#allocation2 + $0x38] sm:$0xff]
    %v71 = vld [vmem:[#allocation2 + $0x40] sm:$0xff]
    %v72 = vld [vmem:[#allocation2 + $0x48] sm:$0xff]
    %v73 = vld [vmem:[#allocation2 + $0x50] sm:$0xff]
    %v74 = vld [vmem:[#allocation2 + $0x58] sm:$0xff]
    %v75 = vld [vmem:[#allocation2 + $0x60] sm:$0xff]
    %v76 = vld [vmem:[#allocation2 + $0x68] sm:$0xff]
    %v77 = vld [vmem:[#allocation2 + $0x70] sm:$0xff]
    %v78 = vld [vmem:[#allocation2 + $0x78] sm:$0xff]
    %79 = vmatprep.subr.mxu0 0.0
    %80 = vmatpush1.msra.mxu0 %v78
    %81 = vmatprep.subr.mxu0 0.0
    %82 = vmatpush1.msra.mxu0 %v77
    %83 = vmatprep.subr.mxu0 0.0
    %84 = vmatpush1.msra.mxu0 %v76
    %85 = vmatprep.subr.mxu0 0.0
    %86 = vmatpush1.msra.mxu0 %v75
    %87 = vmatprep.subr.mxu0 0.0
    %88 = vmatpush1.msra.mxu0 %v74
    %89 = vmatprep.subr.mxu0 0.0
    %90 = vmatpush1.msra.mxu0 %v73
    %91 = vmatprep.subr.mxu0 0.0
    %92 = vmatpush1.msra.mxu0 %v72
    %93 = vmatprep.subr.mxu0 0.0
    %94 = vmatpush1.msra.mxu0 %v71
    %95 = vmatprep.subr.mxu0 0.0
    %96 = vmatpush1.msra.mxu0 %v70
    %97 = vmatprep.subr.mxu0 0.0
    %98 = vmatpush1.msra.mxu0 %v69
    %99 = vmatprep.subr.mxu0 0.0
    %100 = vmatpush1.msra.mxu0 %v68
    %101 = vmatprep.subr.mxu0 0.0
    %102 = vmatpush1.msra.mxu0 %v67
    %103 = vmatprep.subr.mxu0 0.0
    %104 = vmatpush1.msra.mxu0 %v66
    %105 = vmatprep.subr.mxu0 0.0
    %106 = vmatpush1.msra.mxu0 %v65
    %107 = vmatprep.subr.mxu0 0.0
    %108 = vmatpush1.msra.mxu0 %v64
    %109 = vmatprep.subr.mxu0 0.0
    %110 = vmatpush1.msra.mxu0 %v63
    %111 = vmatprep.subr.mxu0 0.0
    %112 = vmatpush2.msra.mxu0 0.0
    %113 = vmatprep.subr.mxu0 0.0
    %114 = vmatpush2.msra.mxu0 0.0
    %115 = vmatprep.subr.mxu0 0.0
    %116 = vmatpush2.msra.mxu0 0.0
    %117 = vmatprep.subr.mxu0 0.0
    %118 = vmatpush2.msra.mxu0 0.0
    %119 = vmatprep.subr.mxu0 0.0
    %120 = vmatpush2.msra.mxu0 0.0
    %121 = vmatprep.subr.mxu0 0.0
    %122 = vmatpush2.msra.mxu0 0.0
    %123 = vmatprep.subr.mxu0 0.0
    %124 = vmatpush2.msra.mxu0 0.0
    %125 = vmatprep.subr.mxu0 0.0
    %126 = vmatpush2.msra.mxu0 0.0
    %127 = vmatprep.subr.mxu0 0.0
    %128 = vmatpush2.msra.mxu0 0.0
    %129 = vmatprep.subr.mxu0 0.0
    %130 = vmatpush2.msra.mxu0 0.0
    %131 = vmatprep.subr.mxu0 0.0
    %132 = vmatpush2.msra.mxu0 0.0
    %133 = vmatprep.subr.mxu0 0.0
    %134 = vmatpush2.msra.mxu0 0.0
    %135 = vmatprep.subr.mxu0 0.0
    %136 = vmatpush2.msra.mxu0 0.0
    %137 = vmatprep.subr.mxu0 0.0
    %138 = vmatpush2.msra.mxu0 0.0
    %139 = vmatprep.subr.mxu0 0.0
    %140 = vmatpush2.msra.mxu0 0.0
    %141 = vmatprep.subr.mxu0 0.0
    %142 = vmatpush2.msra.mxu0 0.0
    %143 = vmatprep.mubr.f32.mxu0 0.0
    %144 = vmatmul.mubr.f32.gmra.mxu0 %v47
    %v145 = vpop.f32.mrf.mxu0
    %v146 = vadd.f32 0.0, %v145
    %v147 = vpop.f32.mrf.mxu0
    %148 = vmatprep.mubr.f32.mxu0 0.0
    %149 = vmatmul.mubr.f32.gmra.mxu0 %v48
    %v150 = vpop.f32.mrf.mxu0
    %v151 = vadd.f32 0.0, %v150
    %v152 = vpop.f32.mrf.mxu0
    %153 = vmatprep.mubr.f32.mxu0 0.0
    %154 = vmatmul.mubr.f32.gmra.mxu0 %v49
    %v155 = vpop.f32.mrf.mxu0
    %v156 = vadd.f32 0.0, %v155
    %v157 = vpop.f32.mrf.mxu0
    %158 = vmatprep.mubr.f32.mxu0 0.0
    %159 = vmatmul.mubr.f32.gmra.mxu0 %v50
    %v160 = vpop.f32.mrf.mxu0
    %v161 = vadd.f32 0.0, %v160
    %v162 = vpop.f32.mrf.mxu0
    %163 = vmatprep.mubr.f32.mxu0 0.0
    %164 = vmatmul.mubr.f32.gmra.mxu0 %v51
    %v165 = vpop.f32.mrf.mxu0
    %v166 = vadd.f32 0.0, %v165
    %v167 = vpop.f32.mrf.mxu0
    %168 = vmatprep.mubr.f32.mxu0 0.0
    %169 = vmatmul.mubr.f32.gmra.mxu0 %v52
    %v170 = vpop.f32.mrf.mxu0
    %v171 = vadd.f32 0.0, %v170
    %v172 = vpop.f32.mrf.mxu0
    %173 = vmatprep.mubr.f32.mxu0 0.0
    %174 = vmatmul.mubr.f32.gmra.mxu0 %v53
    %v175 = vpop.f32.mrf.mxu0
    %v176 = vadd.f32 0.0, %v175
    %v177 = vpop.f32.mrf.mxu0
    %178 = vmatprep.mubr.f32.mxu0 0.0
    %179 = vmatmul.mubr.f32.gmra.mxu0 %v54
    %v180 = vpop.f32.mrf.mxu0
    %v181 = vadd.f32 0.0, %v180
    %v182 = vpop.f32.mrf.mxu0
    %183 = vmatprep.mubr.f32.mxu0 0.0
    %184 = vmatmul.mubr.f32.gmra.mxu0 %v55
    %v185 = vpop.f32.mrf.mxu0
    %v186 = vadd.f32 0.0, %v185
    %v187 = vpop.f32.mrf.mxu0
    %188 = vmatprep.mubr.f32.mxu0 0.0
    %189 = vmatmul.mubr.f32.gmra.mxu0 %v56
    %v190 = vpop.f32.mrf.mxu0
    %v191 = vadd.f32 0.0, %v190
    %v192 = vpop.f32.mrf.mxu0
    %193 = vmatprep.mubr.f32.mxu0 0.0
    %194 = vmatmul.mubr.f32.gmra.mxu0 %v57
    %v195 = vpop.f32.mrf.mxu0
    %v196 = vadd.f32 0.0, %v195
    %v197 = vpop.f32.mrf.mxu0
    %198 = vmatprep.mubr.f32.mxu0 0.0
    %199 = vmatmul.mubr.f32.gmra.mxu0 %v58
    %v200 = vpop.f32.mrf.mxu0
    %v201 = vadd.f32 0.0, %v200
    %v202 = vpop.f32.mrf.mxu0
    %203 = vmatprep.mubr.f32.mxu0 0.0
    %204 = vmatmul.mubr.f32.gmra.mxu0 %v59
    %v205 = vpop.f32.mrf.mxu0
    %v206 = vadd.f32 0.0, %v205
    %v207 = vpop.f32.mrf.mxu0
    %208 = vmatprep.mubr.f32.mxu0 0.0
    %209 = vmatmul.mubr.f32.gmra.mxu0 %v60
    %v210 = vpop.f32.mrf.mxu0
    %v211 = vadd.f32 0.0, %v210
    %v212 = vpop.f32.mrf.mxu0
    %213 = vmatprep.mubr.f32.mxu0 0.0
    %214 = vmatmul.mubr.f32.gmra.mxu0 %v61
    %v215 = vpop.f32.mrf.mxu0
    %v216 = vadd.f32 0.0, %v215
    %v217 = vpop.f32.mrf.mxu0
    %218 = vmatprep.mubr.f32.mxu0 0.0
    %219 = vmatmul.mubr.f32.gmra.mxu0 %v62
    %v220 = vpop.f32.mrf.mxu0
    %v221 = vadd.f32 0.0, %v220
    %v222 = vpop.f32.mrf.mxu0
    %223 = vdwg.mxu0
    %v224 = vld [vmem:[%s3] sm:$0x1]
    %v226 = vlaneseq
    %v227 = vshrl.u32 %v226, 7
    %v228 = vsub.s32 0, %v227
    %v229 = vrot.slane %v224, %v228
    %231 = vmatprep.subr.mxu0 0.0
    %232 = vmatpush1.msra.mxu0 %v221
    %233 = vmatprep.subr.mxu0 0.0
    %234 = vmatpush1.msra.mxu0 %v216
    %235 = vmatprep.subr.mxu0 0.0
    %236 = vmatpush1.msra.mxu0 %v211
    %237 = vmatprep.subr.mxu0 0.0
    %238 = vmatpush1.msra.mxu0 %v206
    %239 = vmatprep.subr.mxu0 0.0
    %240 = vmatpush1.msra.mxu0 %v201
    %241 = vmatprep.subr.mxu0 0.0
    %242 = vmatpush1.msra.mxu0 %v196
    %243 = vmatprep.subr.mxu0 0.0
    %244 = vmatpush1.msra.mxu0 %v191
    %245 = vmatprep.subr.mxu0 0.0
    %246 = vmatpush1.msra.mxu0 %v186
    %247 = vmatprep.subr.mxu0 0.0
    %248 = vmatpush1.msra.mxu0 %v181
    %249 = vmatprep.subr.mxu0 0.0
    %250 = vmatpush1.msra.mxu0 %v176
    %251 = vmatprep.subr.mxu0 0.0
    %252 = vmatpush1.msra.mxu0 %v171
    %253 = vmatprep.subr.mxu0 0.0
    %254 = vmatpush1.msra.mxu0 %v166
    %255 = vmatprep.subr.mxu0 0.0
    %256 = vmatpush1.msra.mxu0 %v161
    %257 = vmatprep.subr.mxu0 0.0
    %258 = vmatpush1.msra.mxu0 %v156
    %259 = vmatprep.subr.mxu0 0.0
    %260 = vmatpush1.msra.mxu0 %v151
    %261 = vmatprep.subr.mxu0 0.0
    %262 = vmatpush1.msra.mxu0 %v146
    %263 = vmatprep.subr.mxu0 0.0
    %264 = vmatpush2.msra.mxu0 0.0
    %265 = vmatprep.subr.mxu0 0.0
    %266 = vmatpush2.msra.mxu0 0.0
    %267 = vmatprep.subr.mxu0 0.0
    %268 = vmatpush2.msra.mxu0 0.0
    %269 = vmatprep.subr.mxu0 0.0
    %270 = vmatpush2.msra.mxu0 0.0
    %271 = vmatprep.subr.mxu0 0.0
    %272 = vmatpush2.msra.mxu0 0.0
    %273 = vmatprep.subr.mxu0 0.0
    %274 = vmatpush2.msra.mxu0 0.0
    %275 = vmatprep.subr.mxu0 0.0
    %276 = vmatpush2.msra.mxu0 0.0
    %277 = vmatprep.subr.mxu0 0.0
    %278 = vmatpush2.msra.mxu0 0.0
    %279 = vmatprep.subr.mxu0 0.0
    %280 = vmatpush2.msra.mxu0 0.0
    %281 = vmatprep.subr.mxu0 0.0
    %282 = vmatpush2.msra.mxu0 0.0
    %283 = vmatprep.subr.mxu0 0.0
    %284 = vmatpush2.msra.mxu0 0.0
    %285 = vmatprep.subr.mxu0 0.0
    %286 = vmatpush2.msra.mxu0 0.0
    %287 = vmatprep.subr.mxu0 0.0
    %288 = vmatpush2.msra.mxu0 0.0
    %289 = vmatprep.subr.mxu0 0.0
    %290 = vmatpush2.msra.mxu0 0.0
    %291 = vmatprep.subr.mxu0 0.0
    %292 = vmatpush2.msra.mxu0 0.0
    %293 = vmatprep.subr.mxu0 0.0
    %294 = vmatpush2.msra.mxu0 0.0
    %295 = vmatprep.mubr.f32.mxu0 0.0
    %296 = vmatmul.mubr.f32.gmra.mxu0 %v31
    %v297 = vpop.f32.mrf.mxu0
    %v298 = vadd.f32 %v229, %v297
    %v299 = vpop.f32.mrf.mxu0
    %300 = vmatprep.mubr.f32.mxu0 0.0
    %301 = vmatmul.mubr.f32.gmra.mxu0 %v32
    %v302 = vpop.f32.mrf.mxu0
    %v303 = vadd.f32 %v229, %v302
    %v304 = vpop.f32.mrf.mxu0
    %305 = vmatprep.mubr.f32.mxu0 0.0
    %306 = vmatmul.mubr.f32.gmra.mxu0 %v33
    %v307 = vpop.f32.mrf.mxu0
    %v308 = vadd.f32 %v229, %v307
    %v309 = vpop.f32.mrf.mxu0
    %310 = vmatprep.mubr.f32.mxu0 0.0
    %311 = vmatmul.mubr.f32.gmra.mxu0 %v34
    %v312 = vpop.f32.mrf.mxu0
    %v313 = vadd.f32 %v229, %v312
    %v314 = vpop.f32.mrf.mxu0
    %315 = vmatprep.mubr.f32.mxu0 0.0
    %316 = vmatmul.mubr.f32.gmra.mxu0 %v35
    %v317 = vpop.f32.mrf.mxu0
    %v318 = vadd.f32 %v229, %v317
    %v319 = vpop.f32.mrf.mxu0
    %320 = vmatprep.mubr.f32.mxu0 0.0
    %321 = vmatmul.mubr.f32.gmra.mxu0 %v36
    %v322 = vpop.f32.mrf.mxu0
    %v323 = vadd.f32 %v229, %v322
    %v324 = vpop.f32.mrf.mxu0
    %325 = vmatprep.mubr.f32.mxu0 0.0
    %326 = vmatmul.mubr.f32.gmra.mxu0 %v37
    %v327 = vpop.f32.mrf.mxu0
    %v328 = vadd.f32 %v229, %v327
    %v329 = vpop.f32.mrf.mxu0
    %330 = vmatprep.mubr.f32.mxu0 0.0
    %331 = vmatmul.mubr.f32.gmra.mxu0 %v38
    %v332 = vpop.f32.mrf.mxu0
    %v333 = vadd.f32 %v229, %v332
    %v334 = vpop.f32.mrf.mxu0
    %335 = vmatprep.mubr.f32.mxu0 0.0
    %336 = vmatmul.mubr.f32.gmra.mxu0 %v39
    %v337 = vpop.f32.mrf.mxu0
    %v338 = vadd.f32 %v229, %v337
    %v339 = vpop.f32.mrf.mxu0
    %340 = vmatprep.mubr.f32.mxu0 0.0
    %341 = vmatmul.mubr.f32.gmra.mxu0 %v40
    %v342 = vpop.f32.mrf.mxu0
    %v343 = vadd.f32 %v229, %v342
    %v344 = vpop.f32.mrf.mxu0
    %345 = vmatprep.mubr.f32.mxu0 0.0
    %346 = vmatmul.mubr.f32.gmra.mxu0 %v41
    %v347 = vpop.f32.mrf.mxu0
    %v348 = vadd.f32 %v229, %v347
    %v349 = vpop.f32.mrf.mxu0
    %350 = vmatprep.mubr.f32.mxu0 0.0
    %351 = vmatmul.mubr.f32.gmra.mxu0 %v42
    %v352 = vpop.f32.mrf.mxu0
    %v353 = vadd.f32 %v229, %v352
    %v354 = vpop.f32.mrf.mxu0
    %355 = vmatprep.mubr.f32.mxu0 0.0
    %356 = vmatmul.mubr.f32.gmra.mxu0 %v43
    %v357 = vpop.f32.mrf.mxu0
    %v358 = vadd.f32 %v229, %v357
    %v359 = vpop.f32.mrf.mxu0
    %360 = vmatprep.mubr.f32.mxu0 0.0
    %361 = vmatmul.mubr.f32.gmra.mxu0 %v44
    %v362 = vpop.f32.mrf.mxu0
    %v363 = vadd.f32 %v229, %v362
    %v364 = vpop.f32.mrf.mxu0
    %365 = vmatprep.mubr.f32.mxu0 0.0
    %366 = vmatmul.mubr.f32.gmra.mxu0 %v45
    %v367 = vpop.f32.mrf.mxu0
    %v368 = vadd.f32 %v229, %v367
    %v369 = vpop.f32.mrf.mxu0
    %370 = vmatprep.mubr.f32.mxu0 0.0
    %371 = vmatmul.mubr.f32.gmra.mxu0 %v46
    %v372 = vpop.f32.mrf.mxu0
    %v373 = vadd.f32 %v229, %v372
    %v374 = vpop.f32.mrf.mxu0
    %375 = vdwg.mxu0
    %v376 = vmax.f32 %v298, 0.0
    %v377 = vmax.f32 %v303, 0.0
    %v378 = vmax.f32 %v308, 0.0
    %v379 = vmax.f32 %v313, 0.0
    %v380 = vmax.f32 %v318, 0.0
    %v381 = vmax.f32 %v323, 0.0
    %v382 = vmax.f32 %v328, 0.0
    %v383 = vmax.f32 %v333, 0.0
    %v384 = vmax.f32 %v338, 0.0
    %v385 = vmax.f32 %v343, 0.0
    %v386 = vmax.f32 %v348, 0.0
    %v387 = vmax.f32 %v353, 0.0
    %v388 = vmax.f32 %v358, 0.0
    %v389 = vmax.f32 %v363, 0.0
    %v390 = vmax.f32 %v368, 0.0
    %v391 = vmax.f32 %v373, 0.0
    %s392 = scalar_lea.vmem [#allocation2], 128
    %v393 = vld [vmem:[%s392] sm:$0xff]
    %v394 = vld [vmem:[%s392 + $0x8] sm:$0xff]
    %v395 = vld [vmem:[%s392 + $0x10] sm:$0xff]
    %v396 = vld [vmem:[%s392 + $0x18] sm:$0xff]
    %v397 = vld [vmem:[%s392 + $0x20] sm:$0xff]
    %v398 = vld [vmem:[%s392 + $0x28] sm:$0xff]
    %v399 = vld [vmem:[%s392 + $0x30] sm:$0xff]
    %v400 = vld [vmem:[%s392 + $0x38] sm:$0xff]
    %v401 = vld [vmem:[%s392 + $0x40] sm:$0xff]
    %v402 = vld [vmem:[%s392 + $0x48] sm:$0xff]
    %v403 = vld [vmem:[%s392 + $0x50] sm:$0xff]
    %v404 = vld [vmem:[%s392 + $0x58] sm:$0xff]
    %v405 = vld [vmem:[%s392 + $0x60] sm:$0xff]
    %v406 = vld [vmem:[%s392 + $0x68] sm:$0xff]
    %v407 = vld [vmem:[%s392 + $0x70] sm:$0xff]
    %v408 = vld [vmem:[%s392 + $0x78] sm:$0xff]
    %409 = vmatprep.subr.mxu0 0.0
    %410 = vmatpush1.msra.mxu0 %v408
    %411 = vmatprep.subr.mxu0 0.0
    %412 = vmatpush1.msra.mxu0 %v407
    %413 = vmatprep.subr.mxu0 0.0
    %414 = vmatpush1.msra.mxu0 %v406
    %415 = vmatprep.subr.mxu0 0.0
    %416 = vmatpush1.msra.mxu0 %v405
    %417 = vmatprep.subr.mxu0 0.0
    %418 = vmatpush1.msra.mxu0 %v404
    %419 = vmatprep.subr.mxu0 0.0
    %420 = vmatpush1.msra.mxu0 %v403
    %421 = vmatprep.subr.mxu0 0.0
    %422 = vmatpush1.msra.mxu0 %v402
    %423 = vmatprep.subr.mxu0 0.0
    %424 = vmatpush1.msra.mxu0 %v401
    %425 = vmatprep.subr.mxu0 0.0
    %426 = vmatpush1.msra.mxu0 %v400
    %427 = vmatprep.subr.mxu0 0.0
    %428 = vmatpush1.msra.mxu0 %v399
    %429 = vmatprep.subr.mxu0 0.0
    %430 = vmatpush1.msra.mxu0 %v398
    %431 = vmatprep.subr.mxu0 0.0
    %432 = vmatpush1.msra.mxu0 %v397
    %433 = vmatprep.subr.mxu0 0.0
    %434 = vmatpush1.msra.mxu0 %v396
    %435 = vmatprep.subr.mxu0 0.0
    %436 = vmatpush1.msra.mxu0 %v395
    %437 = vmatprep.subr.mxu0 0.0
    %438 = vmatpush1.msra.mxu0 %v394
    %439 = vmatprep.subr.mxu0 0.0
    %440 = vmatpush1.msra.mxu0 %v393
    %441 = vmatprep.subr.mxu0 0.0
    %442 = vmatpush2.msra.mxu0 0.0
    %443 = vmatprep.subr.mxu0 0.0
    %444 = vmatpush2.msra.mxu0 0.0
    %445 = vmatprep.subr.mxu0 0.0
    %446 = vmatpush2.msra.mxu0 0.0
    %447 = vmatprep.subr.mxu0 0.0
    %448 = vmatpush2.msra.mxu0 0.0
    %449 = vmatprep.subr.mxu0 0.0
    %450 = vmatpush2.msra.mxu0 0.0
    %451 = vmatprep.subr.mxu0 0.0
    %452 = vmatpush2.msra.mxu0 0.0
    %453 = vmatprep.subr.mxu0 0.0
    %454 = vmatpush2.msra.mxu0 0.0
    %455 = vmatprep.subr.mxu0 0.0
    %456 = vmatpush2.msra.mxu0 0.0
    %457 = vmatprep.subr.mxu0 0.0
    %458 = vmatpush2.msra.mxu0 0.0
    %459 = vmatprep.subr.mxu0 0.0
    %460 = vmatpush2.msra.mxu0 0.0
    %461 = vmatprep.subr.mxu0 0.0
    %462 = vmatpush2.msra.mxu0 0.0
    %463 = vmatprep.subr.mxu0 0.0
    %464 = vmatpush2.msra.mxu0 0.0
    %465 = vmatprep.subr.mxu0 0.0
    %466 = vmatpush2.msra.mxu0 0.0
    %467 = vmatprep.subr.mxu0 0.0
    %468 = vmatpush2.msra.mxu0 0.0
    %469 = vmatprep.subr.mxu0 0.0
    %470 = vmatpush2.msra.mxu0 0.0
    %471 = vmatprep.subr.mxu0 0.0
    %472 = vmatpush2.msra.mxu0 0.0
    %473 = vmatprep.mubr.f32.mxu0 0.0
    %474 = vmatmul.mubr.f32.gmra.mxu0 %v376
    %v475 = vpop.f32.mrf.mxu0
    %v476 = vadd.f32 0.0, %v475
    %v477 = vpop.f32.mrf.mxu0
    %478 = vmatprep.mubr.f32.mxu0 0.0
    %479 = vmatmul.mubr.f32.gmra.mxu0 %v377
    %v480 = vpop.f32.mrf.mxu0
    %v481 = vadd.f32 0.0, %v480
    %v482 = vpop.f32.mrf.mxu0
    %483 = vmatprep.mubr.f32.mxu0 0.0
    %484 = vmatmul.mubr.f32.gmra.mxu0 %v378
    %v485 = vpop.f32.mrf.mxu0
    %v486 = vadd.f32 0.0, %v485
    %v487 = vpop.f32.mrf.mxu0
    %488 = vmatprep.mubr.f32.mxu0 0.0
    %489 = vmatmul.mubr.f32.gmra.mxu0 %v379
    %v490 = vpop.f32.mrf.mxu0
    %v491 = vadd.f32 0.0, %v490
    %v492 = vpop.f32.mrf.mxu0
    %493 = vmatprep.mubr.f32.mxu0 0.0
    %494 = vmatmul.mubr.f32.gmra.mxu0 %v380
    %v495 = vpop.f32.mrf.mxu0
    %v496 = vadd.f32 0.0, %v495
    %v497 = vpop.f32.mrf.mxu0
    %498 = vmatprep.mubr.f32.mxu0 0.0
    %499 = vmatmul.mubr.f32.gmra.mxu0 %v381
    %v500 = vpop.f32.mrf.mxu0
    %v501 = vadd.f32 0.0, %v500
    %v502 = vpop.f32.mrf.mxu0
    %503 = vmatprep.mubr.f32.mxu0 0.0
    %504 = vmatmul.mubr.f32.gmra.mxu0 %v382
    %v505 = vpop.f32.mrf.mxu0
    %v506 = vadd.f32 0.0, %v505
    %v507 = vpop.f32.mrf.mxu0
    %508 = vmatprep.mubr.f32.mxu0 0.0
    %509 = vmatmul.mubr.f32.gmra.mxu0 %v383
    %v510 = vpop.f32.mrf.mxu0
    %v511 = vadd.f32 0.0, %v510
    %v512 = vpop.f32.mrf.mxu0
    %513 = vmatprep.mubr.f32.mxu0 0.0
    %514 = vmatmul.mubr.f32.gmra.mxu0 %v384
    %v515 = vpop.f32.mrf.mxu0
    %v516 = vadd.f32 0.0, %v515
    %v517 = vpop.f32.mrf.mxu0
    %518 = vmatprep.mubr.f32.mxu0 0.0
    %519 = vmatmul.mubr.f32.gmra.mxu0 %v385
    %v520 = vpop.f32.mrf.mxu0
    %v521 = vadd.f32 0.0, %v520
    %v522 = vpop.f32.mrf.mxu0
    %523 = vmatprep.mubr.f32.mxu0 0.0
    %524 = vmatmul.mubr.f32.gmra.mxu0 %v386
    %v525 = vpop.f32.mrf.mxu0
    %v526 = vadd.f32 0.0, %v525
    %v527 = vpop.f32.mrf.mxu0
    %528 = vmatprep.mubr.f32.mxu0 0.0
    %529 = vmatmul.mubr.f32.gmra.mxu0 %v387
    %v530 = vpop.f32.mrf.mxu0
    %v531 = vadd.f32 0.0, %v530
    %v532 = vpop.f32.mrf.mxu0
    %533 = vmatprep.mubr.f32.mxu0 0.0
    %534 = vmatmul.mubr.f32.gmra.mxu0 %v388
    %v535 = vpop.f32.mrf.mxu0
    %v536 = vadd.f32 0.0, %v535
    %v537 = vpop.f32.mrf.mxu0
    %538 = vmatprep.mubr.f32.mxu0 0.0
    %539 = vmatmul.mubr.f32.gmra.mxu0 %v389
    %v540 = vpop.f32.mrf.mxu0
    %v541 = vadd.f32 0.0, %v540
    %v542 = vpop.f32.mrf.mxu0
    %543 = vmatprep.mubr.f32.mxu0 0.0
    %544 = vmatmul.mubr.f32.gmra.mxu0 %v390
    %v545 = vpop.f32.mrf.mxu0
    %v546 = vadd.f32 0.0, %v545
    %v547 = vpop.f32.mrf.mxu0
    %548 = vmatprep.mubr.f32.mxu0 0.0
    %549 = vmatmul.mubr.f32.gmra.mxu0 %v391
    %v550 = vpop.f32.mrf.mxu0
    %v551 = vadd.f32 0.0, %v550
    %v552 = vpop.f32.mrf.mxu0
    %553 = vdwg.mxu0
    %s554 = scalar_lea.vmem %s3, 1
    %v555 = vld [vmem:[%s554] sm:$0x1]
    %v557 = vlaneseq
    %v558 = vshrl.u32 %v557, 7
    %v559 = vsub.s32 0, %v558
    %v560 = vrot.slane %v555, %v559
    %562 = vmatprep.subr.mxu0 0.0
    %563 = vmatpush1.msra.mxu0 %v551
    %564 = vmatprep.subr.mxu0 0.0
    %565 = vmatpush1.msra.mxu0 %v546
    %566 = vmatprep.subr.mxu0 0.0
    %567 = vmatpush1.msra.mxu0 %v541
    %568 = vmatprep.subr.mxu0 0.0
    %569 = vmatpush1.msra.mxu0 %v536
    %570 = vmatprep.subr.mxu0 0.0
    %571 = vmatpush1.msra.mxu0 %v531
    %572 = vmatprep.subr.mxu0 0.0
    %573 = vmatpush1.msra.mxu0 %v526
    %574 = vmatprep.subr.mxu0 0.0
    %575 = vmatpush1.msra.mxu0 %v521
    %576 = vmatprep.subr.mxu0 0.0
    %577 = vmatpush1.msra.mxu0 %v516
    %578 = vmatprep.subr.mxu0 0.0
    %579 = vmatpush1.msra.mxu0 %v511
    %580 = vmatprep.subr.mxu0 0.0
    %581 = vmatpush1.msra.mxu0 %v506
    %582 = vmatprep.subr.mxu0 0.0
    %583 = vmatpush1.msra.mxu0 %v501
    %584 = vmatprep.subr.mxu0 0.0
    %585 = vmatpush1.msra.mxu0 %v496
    %586 = vmatprep.subr.mxu0 0.0
    %587 = vmatpush1.msra.mxu0 %v491
    %588 = vmatprep.subr.mxu0 0.0
    %589 = vmatpush1.msra.mxu0 %v486
    %590 = vmatprep.subr.mxu0 0.0
    %591 = vmatpush1.msra.mxu0 %v481
    %592 = vmatprep.subr.mxu0 0.0
    %593 = vmatpush1.msra.mxu0 %v476
    %594 = vmatprep.subr.mxu0 0.0
    %595 = vmatpush2.msra.mxu0 0.0
    %596 = vmatprep.subr.mxu0 0.0
    %597 = vmatpush2.msra.mxu0 0.0
    %598 = vmatprep.subr.mxu0 0.0
    %599 = vmatpush2.msra.mxu0 0.0
    %600 = vmatprep.subr.mxu0 0.0
    %601 = vmatpush2.msra.mxu0 0.0
    %602 = vmatprep.subr.mxu0 0.0
    %603 = vmatpush2.msra.mxu0 0.0
    %604 = vmatprep.subr.mxu0 0.0
    %605 = vmatpush2.msra.mxu0 0.0
    %606 = vmatprep.subr.mxu0 0.0
    %607 = vmatpush2.msra.mxu0 0.0
    %608 = vmatprep.subr.mxu0 0.0
    %609 = vmatpush2.msra.mxu0 0.0
    %610 = vmatprep.subr.mxu0 0.0
    %611 = vmatpush2.msra.mxu0 0.0
    %612 = vmatprep.subr.mxu0 0.0
    %613 = vmatpush2.msra.mxu0 0.0
    %614 = vmatprep.subr.mxu0 0.0
    %615 = vmatpush2.msra.mxu0 0.0
    %616 = vmatprep.subr.mxu0 0.0
    %617 = vmatpush2.msra.mxu0 0.0
    %618 = vmatprep.subr.mxu0 0.0
    %619 = vmatpush2.msra.mxu0 0.0
    %620 = vmatprep.subr.mxu0 0.0
    %621 = vmatpush2.msra.mxu0 0.0
    %622 = vmatprep.subr.mxu0 0.0
    %623 = vmatpush2.msra.mxu0 0.0
    %624 = vmatprep.subr.mxu0 0.0
    %625 = vmatpush2.msra.mxu0 0.0
    %626 = vmatprep.mubr.f32.mxu0 0.0
    %627 = vmatmul.mubr.f32.gmra.mxu0 %v31
    %v628 = vpop.f32.mrf.mxu0
    %v629 = vadd.f32 %v560, %v628
    %v630 = vpop.f32.mrf.mxu0
    %631 = vmatprep.mubr.f32.mxu0 0.0
    %632 = vmatmul.mubr.f32.gmra.mxu0 %v32
    %v633 = vpop.f32.mrf.mxu0
    %v634 = vadd.f32 %v560, %v633
    %v635 = vpop.f32.mrf.mxu0
    %636 = vmatprep.mubr.f32.mxu0 0.0
    %637 = vmatmul.mubr.f32.gmra.mxu0 %v33
    %v638 = vpop.f32.mrf.mxu0
    %v639 = vadd.f32 %v560, %v638
    %v640 = vpop.f32.mrf.mxu0
    %641 = vmatprep.mubr.f32.mxu0 0.0
    %642 = vmatmul.mubr.f32.gmra.mxu0 %v34
    %v643 = vpop.f32.mrf.mxu0
    %v644 = vadd.f32 %v560, %v643
    %v645 = vpop.f32.mrf.mxu0
    %646 = vmatprep.mubr.f32.mxu0 0.0
    %647 = vmatmul.mubr.f32.gmra.mxu0 %v35
    %v648 = vpop.f32.mrf.mxu0
    %v649 = vadd.f32 %v560, %v648
    %v650 = vpop.f32.mrf.mxu0
    %651 = vmatprep.mubr.f32.mxu0 0.0
    %652 = vmatmul.mubr.f32.gmra.mxu0 %v36
    %v653 = vpop.f32.mrf.mxu0
    %v654 = vadd.f32 %v560, %v653
    %v655 = vpop.f32.mrf.mxu0
    %656 = vmatprep.mubr.f32.mxu0 0.0
    %657 = vmatmul.mubr.f32.gmra.mxu0 %v37
    %v658 = vpop.f32.mrf.mxu0
    %v659 = vadd.f32 %v560, %v658
    %v660 = vpop.f32.mrf.mxu0
    %661 = vmatprep.mubr.f32.mxu0 0.0
    %662 = vmatmul.mubr.f32.gmra.mxu0 %v38
    %v663 = vpop.f32.mrf.mxu0
    %v664 = vadd.f32 %v560, %v663
    %v665 = vpop.f32.mrf.mxu0
    %666 = vmatprep.mubr.f32.mxu0 0.0
    %667 = vmatmul.mubr.f32.gmra.mxu0 %v39
    %v668 = vpop.f32.mrf.mxu0
    %v669 = vadd.f32 %v560, %v668
    %v670 = vpop.f32.mrf.mxu0
    %671 = vmatprep.mubr.f32.mxu0 0.0
    %672 = vmatmul.mubr.f32.gmra.mxu0 %v40
    %v673 = vpop.f32.mrf.mxu0
    %v674 = vadd.f32 %v560, %v673
    %v675 = vpop.f32.mrf.mxu0
    %676 = vmatprep.mubr.f32.mxu0 0.0
    %677 = vmatmul.mubr.f32.gmra.mxu0 %v41
    %v678 = vpop.f32.mrf.mxu0
    %v679 = vadd.f32 %v560, %v678
    %v680 = vpop.f32.mrf.mxu0
    %681 = vmatprep.mubr.f32.mxu0 0.0
    %682 = vmatmul.mubr.f32.gmra.mxu0 %v42
    %v683 = vpop.f32.mrf.mxu0
    %v684 = vadd.f32 %v560, %v683
    %v685 = vpop.f32.mrf.mxu0
    %686 = vmatprep.mubr.f32.mxu0 0.0
    %687 = vmatmul.mubr.f32.gmra.mxu0 %v43
    %v688 = vpop.f32.mrf.mxu0
    %v689 = vadd.f32 %v560, %v688
    %v690 = vpop.f32.mrf.mxu0
    %691 = vmatprep.mubr.f32.mxu0 0.0
    %692 = vmatmul.mubr.f32.gmra.mxu0 %v44
    %v693 = vpop.f32.mrf.mxu0
    %v694 = vadd.f32 %v560, %v693
    %v695 = vpop.f32.mrf.mxu0
    %696 = vmatprep.mubr.f32.mxu0 0.0
    %697 = vmatmul.mubr.f32.gmra.mxu0 %v45
    %v698 = vpop.f32.mrf.mxu0
    %v699 = vadd.f32 %v560, %v698
    %v700 = vpop.f32.mrf.mxu0
    %701 = vmatprep.mubr.f32.mxu0 0.0
    %702 = vmatmul.mubr.f32.gmra.mxu0 %v46
    %v703 = vpop.f32.mrf.mxu0
    %v704 = vadd.f32 %v560, %v703
    %v705 = vpop.f32.mrf.mxu0
    %706 = vdwg.mxu0
    %v707 = vmax.f32 %v629, 0.0
    %v708 = vmax.f32 %v634, 0.0
    %v709 = vmax.f32 %v639, 0.0
    %v710 = vmax.f32 %v644, 0.0
    %v711 = vmax.f32 %v649, 0.0
    %v712 = vmax.f32 %v654, 0.0
    %v713 = vmax.f32 %v659, 0.0
    %v714 = vmax.f32 %v664, 0.0
    %v715 = vmax.f32 %v669, 0.0
    %v716 = vmax.f32 %v674, 0.0
    %v717 = vmax.f32 %v679, 0.0
    %v718 = vmax.f32 %v684, 0.0
    %v719 = vmax.f32 %v689, 0.0
    %v720 = vmax.f32 %v694, 0.0
    %v721 = vmax.f32 %v699, 0.0
    %v722 = vmax.f32 %v704, 0.0
    %s723 = scalar_lea.vmem [#allocation2], 256
    %v724 = vld [vmem:[%s723] sm:$0xff]
    %v725 = vld [vmem:[%s723 + $0x8] sm:$0xff]
    %v726 = vld [vmem:[%s723 + $0x10] sm:$0xff]
    %v727 = vld [vmem:[%s723 + $0x18] sm:$0xff]
    %v728 = vld [vmem:[%s723 + $0x20] sm:$0xff]
    %v729 = vld [vmem:[%s723 + $0x28] sm:$0xff]
    %v730 = vld [vmem:[%s723 + $0x30] sm:$0xff]
    %v731 = vld [vmem:[%s723 + $0x38] sm:$0xff]
    %v732 = vld [vmem:[%s723 + $0x40] sm:$0xff]
    %v733 = vld [vmem:[%s723 + $0x48] sm:$0xff]
    %v734 = vld [vmem:[%s723 + $0x50] sm:$0xff]
    %v735 = vld [vmem:[%s723 + $0x58] sm:$0xff]
    %v736 = vld [vmem:[%s723 + $0x60] sm:$0xff]
    %v737 = vld [vmem:[%s723 + $0x68] sm:$0xff]
    %v738 = vld [vmem:[%s723 + $0x70] sm:$0xff]
    %v739 = vld [vmem:[%s723 + $0x78] sm:$0xff]
    %740 = vmatprep.subr.mxu0 0.0
    %741 = vmatpush1.msra.mxu0 %v739
    %742 = vmatprep.subr.mxu0 0.0
    %743 = vmatpush1.msra.mxu0 %v738
    %744 = vmatprep.subr.mxu0 0.0
    %745 = vmatpush1.msra.mxu0 %v737
    %746 = vmatprep.subr.mxu0 0.0
    %747 = vmatpush1.msra.mxu0 %v736
    %748 = vmatprep.subr.mxu0 0.0
    %749 = vmatpush1.msra.mxu0 %v735
    %750 = vmatprep.subr.mxu0 0.0
    %751 = vmatpush1.msra.mxu0 %v734
    %752 = vmatprep.subr.mxu0 0.0
    %753 = vmatpush1.msra.mxu0 %v733
    %754 = vmatprep.subr.mxu0 0.0
    %755 = vmatpush1.msra.mxu0 %v732
    %756 = vmatprep.subr.mxu0 0.0
    %757 = vmatpush1.msra.mxu0 %v731
    %758 = vmatprep.subr.mxu0 0.0
    %759 = vmatpush1.msra.mxu0 %v730
    %760 = vmatprep.subr.mxu0 0.0
    %761 = vmatpush1.msra.mxu0 %v729
    %762 = vmatprep.subr.mxu0 0.0
    %763 = vmatpush1.msra.mxu0 %v728
    %764 = vmatprep.subr.mxu0 0.0
    %765 = vmatpush1.msra.mxu0 %v727
    %766 = vmatprep.subr.mxu0 0.0
    %767 = vmatpush1.msra.mxu0 %v726
    %768 = vmatprep.subr.mxu0 0.0
    %769 = vmatpush1.msra.mxu0 %v725
    %770 = vmatprep.subr.mxu0 0.0
    %771 = vmatpush1.msra.mxu0 %v724
    %772 = vmatprep.subr.mxu0 0.0
    %773 = vmatpush2.msra.mxu0 0.0
    %774 = vmatprep.subr.mxu0 0.0
    %775 = vmatpush2.msra.mxu0 0.0
    %776 = vmatprep.subr.mxu0 0.0
    %777 = vmatpush2.msra.mxu0 0.0
    %778 = vmatprep.subr.mxu0 0.0
    %779 = vmatpush2.msra.mxu0 0.0
    %780 = vmatprep.subr.mxu0 0.0
    %781 = vmatpush2.msra.mxu0 0.0
    %782 = vmatprep.subr.mxu0 0.0
    %783 = vmatpush2.msra.mxu0 0.0
    %784 = vmatprep.subr.mxu0 0.0
    %785 = vmatpush2.msra.mxu0 0.0
    %786 = vmatprep.subr.mxu0 0.0
    %787 = vmatpush2.msra.mxu0 0.0
    %788 = vmatprep.subr.mxu0 0.0
    %789 = vmatpush2.msra.mxu0 0.0
    %790 = vmatprep.subr.mxu0 0.0
    %791 = vmatpush2.msra.mxu0 0.0
    %792 = vmatprep.subr.mxu0 0.0
    %793 = vmatpush2.msra.mxu0 0.0
    %794 = vmatprep.subr.mxu0 0.0
    %795 = vmatpush2.msra.mxu0 0.0
    %796 = vmatprep.subr.mxu0 0.0
    %797 = vmatpush2.msra.mxu0 0.0
    %798 = vmatprep.subr.mxu0 0.0
    %799 = vmatpush2.msra.mxu0 0.0
    %800 = vmatprep.subr.mxu0 0.0
    %801 = vmatpush2.msra.mxu0 0.0
    %802 = vmatprep.subr.mxu0 0.0
    %803 = vmatpush2.msra.mxu0 0.0
    %804 = vmatprep.mubr.f32.mxu0 0.0
    %805 = vmatmul.mubr.f32.gmra.mxu0 %v707
    %v806 = vpop.f32.mrf.mxu0
    %v807 = vadd.f32 0.0, %v806
    %v808 = vpop.f32.mrf.mxu0
    %809 = vmatprep.mubr.f32.mxu0 0.0
    %810 = vmatmul.mubr.f32.gmra.mxu0 %v708
    %v811 = vpop.f32.mrf.mxu0
    %v812 = vadd.f32 0.0, %v811
    %v813 = vpop.f32.mrf.mxu0
    %814 = vmatprep.mubr.f32.mxu0 0.0
    %815 = vmatmul.mubr.f32.gmra.mxu0 %v709
    %v816 = vpop.f32.mrf.mxu0
    %v817 = vadd.f32 0.0, %v816
    %v818 = vpop.f32.mrf.mxu0
    %819 = vmatprep.mubr.f32.mxu0 0.0
    %820 = vmatmul.mubr.f32.gmra.mxu0 %v710
    %v821 = vpop.f32.mrf.mxu0
    %v822 = vadd.f32 0.0, %v821
    %v823 = vpop.f32.mrf.mxu0
    %824 = vmatprep.mubr.f32.mxu0 0.0
    %825 = vmatmul.mubr.f32.gmra.mxu0 %v711
    %v826 = vpop.f32.mrf.mxu0
    %v827 = vadd.f32 0.0, %v826
    %v828 = vpop.f32.mrf.mxu0
    %829 = vmatprep.mubr.f32.mxu0 0.0
    %830 = vmatmul.mubr.f32.gmra.mxu0 %v712
    %v831 = vpop.f32.mrf.mxu0
    %v832 = vadd.f32 0.0, %v831
    %v833 = vpop.f32.mrf.mxu0
    %834 = vmatprep.mubr.f32.mxu0 0.0
    %835 = vmatmul.mubr.f32.gmra.mxu0 %v713
    %v836 = vpop.f32.mrf.mxu0
    %v837 = vadd.f32 0.0, %v836
    %v838 = vpop.f32.mrf.mxu0
    %839 = vmatprep.mubr.f32.mxu0 0.0
    %840 = vmatmul.mubr.f32.gmra.mxu0 %v714
    %v841 = vpop.f32.mrf.mxu0
    %v842 = vadd.f32 0.0, %v841
    %v843 = vpop.f32.mrf.mxu0
    %844 = vmatprep.mubr.f32.mxu0 0.0
    %845 = vmatmul.mubr.f32.gmra.mxu0 %v715
    %v846 = vpop.f32.mrf.mxu0
    %v847 = vadd.f32 0.0, %v846
    %v848 = vpop.f32.mrf.mxu0
    %849 = vmatprep.mubr.f32.mxu0 0.0
    %850 = vmatmul.mubr.f32.gmra.mxu0 %v716
    %v851 = vpop.f32.mrf.mxu0
    %v852 = vadd.f32 0.0, %v851
    %v853 = vpop.f32.mrf.mxu0
    %854 = vmatprep.mubr.f32.mxu0 0.0
    %855 = vmatmul.mubr.f32.gmra.mxu0 %v717
    %v856 = vpop.f32.mrf.mxu0
    %v857 = vadd.f32 0.0, %v856
    %v858 = vpop.f32.mrf.mxu0
    %859 = vmatprep.mubr.f32.mxu0 0.0
    %860 = vmatmul.mubr.f32.gmra.mxu0 %v718
    %v861 = vpop.f32.mrf.mxu0
    %v862 = vadd.f32 0.0, %v861
    %v863 = vpop.f32.mrf.mxu0
    %864 = vmatprep.mubr.f32.mxu0 0.0
    %865 = vmatmul.mubr.f32.gmra.mxu0 %v719
    %v866 = vpop.f32.mrf.mxu0
    %v867 = vadd.f32 0.0, %v866
    %v868 = vpop.f32.mrf.mxu0
    %869 = vmatprep.mubr.f32.mxu0 0.0
    %870 = vmatmul.mubr.f32.gmra.mxu0 %v720
    %v871 = vpop.f32.mrf.mxu0
    %v872 = vadd.f32 0.0, %v871
    %v873 = vpop.f32.mrf.mxu0
    %874 = vmatprep.mubr.f32.mxu0 0.0
    %875 = vmatmul.mubr.f32.gmra.mxu0 %v721
    %v876 = vpop.f32.mrf.mxu0
    %v877 = vadd.f32 0.0, %v876
    %v878 = vpop.f32.mrf.mxu0
    %879 = vmatprep.mubr.f32.mxu0 0.0
    %880 = vmatmul.mubr.f32.gmra.mxu0 %v722
    %v881 = vpop.f32.mrf.mxu0
    %v882 = vadd.f32 0.0, %v881
    %v883 = vpop.f32.mrf.mxu0
    %884 = vdwg.mxu0
    %s885 = scalar_lea.vmem %s3, 2
    %v886 = vld [vmem:[%s885] sm:$0x1]
    %v888 = vlaneseq
    %v889 = vshrl.u32 %v888, 7
    %v890 = vsub.s32 0, %v889
    %v891 = vrot.slane %v886, %v890
    %893 = vmatprep.subr.mxu0 0.0
    %894 = vmatpush1.msra.mxu0 %v882
    %895 = vmatprep.subr.mxu0 0.0
    %896 = vmatpush1.msra.mxu0 %v877
    %897 = vmatprep.subr.mxu0 0.0
    %898 = vmatpush1.msra.mxu0 %v872
    %899 = vmatprep.subr.mxu0 0.0
    %900 = vmatpush1.msra.mxu0 %v867
    %901 = vmatprep.subr.mxu0 0.0
    %902 = vmatpush1.msra.mxu0 %v862
    %903 = vmatprep.subr.mxu0 0.0
    %904 = vmatpush1.msra.mxu0 %v857
    %905 = vmatprep.subr.mxu0 0.0
    %906 = vmatpush1.msra.mxu0 %v852
    %907 = vmatprep.subr.mxu0 0.0
    %908 = vmatpush1.msra.mxu0 %v847
    %909 = vmatprep.subr.mxu0 0.0
    %910 = vmatpush1.msra.mxu0 %v842
    %911 = vmatprep.subr.mxu0 0.0
    %912 = vmatpush1.msra.mxu0 %v837
    %913 = vmatprep.subr.mxu0 0.0
    %914 = vmatpush1.msra.mxu0 %v832
    %915 = vmatprep.subr.mxu0 0.0
    %916 = vmatpush1.msra.mxu0 %v827
    %917 = vmatprep.subr.mxu0 0.0
    %918 = vmatpush1.msra.mxu0 %v822
    %919 = vmatprep.subr.mxu0 0.0
    %920 = vmatpush1.msra.mxu0 %v817
    %921 = vmatprep.subr.mxu0 0.0
    %922 = vmatpush1.msra.mxu0 %v812
    %923 = vmatprep.subr.mxu0 0.0
    %924 = vmatpush1.msra.mxu0 %v807
    %925 = vmatprep.subr.mxu0 0.0
    %926 = vmatpush2.msra.mxu0 0.0
    %927 = vmatprep.subr.mxu0 0.0
    %928 = vmatpush2.msra.mxu0 0.0
    %929 = vmatprep.subr.mxu0 0.0
    %930 = vmatpush2.msra.mxu0 0.0
    %931 = vmatprep.subr.mxu0 0.0
    %932 = vmatpush2.msra.mxu0 0.0
    %933 = vmatprep.subr.mxu0 0.0
    %934 = vmatpush2.msra.mxu0 0.0
    %935 = vmatprep.subr.mxu0 0.0
    %936 = vmatpush2.msra.mxu0 0.0
    %937 = vmatprep.subr.mxu0 0.0
    %938 = vmatpush2.msra.mxu0 0.0
    %939 = vmatprep.subr.mxu0 0.0
    %940 = vmatpush2.msra.mxu0 0.0
    %941 = vmatprep.subr.mxu0 0.0
    %942 = vmatpush2.msra.mxu0 0.0
    %943 = vmatprep.subr.mxu0 0.0
    %944 = vmatpush2.msra.mxu0 0.0
    %945 = vmatprep.subr.mxu0 0.0
    %946 = vmatpush2.msra.mxu0 0.0
    %947 = vmatprep.subr.mxu0 0.0
    %948 = vmatpush2.msra.mxu0 0.0
    %949 = vmatprep.subr.mxu0 0.0
    %950 = vmatpush2.msra.mxu0 0.0
    %951 = vmatprep.subr.mxu0 0.0
    %952 = vmatpush2.msra.mxu0 0.0
    %953 = vmatprep.subr.mxu0 0.0
    %954 = vmatpush2.msra.mxu0 0.0
    %955 = vmatprep.subr.mxu0 0.0
    %956 = vmatpush2.msra.mxu0 0.0
    %957 = vmatprep.mubr.f32.mxu0 0.0
    %958 = vmatmul.mubr.f32.gmra.mxu0 %v31
    %v959 = vpop.f32.mrf.mxu0
    %v960 = vadd.f32 %v891, %v959
    %v961 = vpop.f32.mrf.mxu0
    %962 = vmatprep.mubr.f32.mxu0 0.0
    %963 = vmatmul.mubr.f32.gmra.mxu0 %v32
    %v964 = vpop.f32.mrf.mxu0
    %v965 = vadd.f32 %v891, %v964
    %v966 = vpop.f32.mrf.mxu0
    %967 = vmatprep.mubr.f32.mxu0 0.0
    %968 = vmatmul.mubr.f32.gmra.mxu0 %v33
    %v969 = vpop.f32.mrf.mxu0
    %v970 = vadd.f32 %v891, %v969
    %v971 = vpop.f32.mrf.mxu0
    %972 = vmatprep.mubr.f32.mxu0 0.0
    %973 = vmatmul.mubr.f32.gmra.mxu0 %v34
    %v974 = vpop.f32.mrf.mxu0
    %v975 = vadd.f32 %v891, %v974
    %v976 = vpop.f32.mrf.mxu0
    %977 = vmatprep.mubr.f32.mxu0 0.0
    %978 = vmatmul.mubr.f32.gmra.mxu0 %v35
    %v979 = vpop.f32.mrf.mxu0
    %v980 = vadd.f32 %v891, %v979
    %v981 = vpop.f32.mrf.mxu0
    %982 = vmatprep.mubr.f32.mxu0 0.0
    %983 = vmatmul.mubr.f32.gmra.mxu0 %v36
    %v984 = vpop.f32.mrf.mxu0
    %v985 = vadd.f32 %v891, %v984
    %v986 = vpop.f32.mrf.mxu0
    %987 = vmatprep.mubr.f32.mxu0 0.0
    %988 = vmatmul.mubr.f32.gmra.mxu0 %v37
    %v989 = vpop.f32.mrf.mxu0
    %v990 = vadd.f32 %v891, %v989
    %v991 = vpop.f32.mrf.mxu0
    %992 = vmatprep.mubr.f32.mxu0 0.0
    %993 = vmatmul.mubr.f32.gmra.mxu0 %v38
    %v994 = vpop.f32.mrf.mxu0
    %v995 = vadd.f32 %v891, %v994
    %v996 = vpop.f32.mrf.mxu0
    %997 = vmatprep.mubr.f32.mxu0 0.0
    %998 = vmatmul.mubr.f32.gmra.mxu0 %v39
    %v999 = vpop.f32.mrf.mxu0
    %v1000 = vadd.f32 %v891, %v999
    %v1001 = vpop.f32.mrf.mxu0
    %1002 = vmatprep.mubr.f32.mxu0 0.0
    %1003 = vmatmul.mubr.f32.gmra.mxu0 %v40
    %v1004 = vpop.f32.mrf.mxu0
    %v1005 = vadd.f32 %v891, %v1004
    %v1006 = vpop.f32.mrf.mxu0
    %1007 = vmatprep.mubr.f32.mxu0 0.0
    %1008 = vmatmul.mubr.f32.gmra.mxu0 %v41
    %v1009 = vpop.f32.mrf.mxu0
    %v1010 = vadd.f32 %v891, %v1009
    %v1011 = vpop.f32.mrf.mxu0
    %1012 = vmatprep.mubr.f32.mxu0 0.0
    %1013 = vmatmul.mubr.f32.gmra.mxu0 %v42
    %v1014 = vpop.f32.mrf.mxu0
    %v1015 = vadd.f32 %v891, %v1014
    %v1016 = vpop.f32.mrf.mxu0
    %1017 = vmatprep.mubr.f32.mxu0 0.0
    %1018 = vmatmul.mubr.f32.gmra.mxu0 %v43
    %v1019 = vpop.f32.mrf.mxu0
    %v1020 = vadd.f32 %v891, %v1019
    %v1021 = vpop.f32.mrf.mxu0
    %1022 = vmatprep.mubr.f32.mxu0 0.0
    %1023 = vmatmul.mubr.f32.gmra.mxu0 %v44
    %v1024 = vpop.f32.mrf.mxu0
    %v1025 = vadd.f32 %v891, %v1024
    %v1026 = vpop.f32.mrf.mxu0
    %1027 = vmatprep.mubr.f32.mxu0 0.0
    %1028 = vmatmul.mubr.f32.gmra.mxu0 %v45
    %v1029 = vpop.f32.mrf.mxu0
    %v1030 = vadd.f32 %v891, %v1029
    %v1031 = vpop.f32.mrf.mxu0
    %1032 = vmatprep.mubr.f32.mxu0 0.0
    %1033 = vmatmul.mubr.f32.gmra.mxu0 %v46
    %v1034 = vpop.f32.mrf.mxu0
    %v1035 = vadd.f32 %v891, %v1034
    %v1036 = vpop.f32.mrf.mxu0
    %1037 = vdwg.mxu0
    %v1038 = vmax.f32 %v960, 0.0
    %v1039 = vmax.f32 %v965, 0.0
    %v1040 = vmax.f32 %v970, 0.0
    %v1041 = vmax.f32 %v975, 0.0
    %v1042 = vmax.f32 %v980, 0.0
    %v1043 = vmax.f32 %v985, 0.0
    %v1044 = vmax.f32 %v990, 0.0
    %v1045 = vmax.f32 %v995, 0.0
    %v1046 = vmax.f32 %v1000, 0.0
    %v1047 = vmax.f32 %v1005, 0.0
    %v1048 = vmax.f32 %v1010, 0.0
    %v1049 = vmax.f32 %v1015, 0.0
    %v1050 = vmax.f32 %v1020, 0.0
    %v1051 = vmax.f32 %v1025, 0.0
    %v1052 = vmax.f32 %v1030, 0.0
    %v1053 = vmax.f32 %v1035, 0.0
    %s1054 = scalar_lea.vmem [#allocation2], 384
    %v1055 = vld [vmem:[%s1054] sm:$0xff]
    %v1056 = vld [vmem:[%s1054 + $0x8] sm:$0xff]
    %v1057 = vld [vmem:[%s1054 + $0x10] sm:$0xff]
    %v1058 = vld [vmem:[%s1054 + $0x18] sm:$0xff]
    %v1059 = vld [vmem:[%s1054 + $0x20] sm:$0xff]
    %v1060 = vld [vmem:[%s1054 + $0x28] sm:$0xff]
    %v1061 = vld [vmem:[%s1054 + $0x30] sm:$0xff]
    %v1062 = vld [vmem:[%s1054 + $0x38] sm:$0xff]
    %v1063 = vld [vmem:[%s1054 + $0x40] sm:$0xff]
    %v1064 = vld [vmem:[%s1054 + $0x48] sm:$0xff]
    %v1065 = vld [vmem:[%s1054 + $0x50] sm:$0xff]
    %v1066 = vld [vmem:[%s1054 + $0x58] sm:$0xff]
    %v1067 = vld [vmem:[%s1054 + $0x60] sm:$0xff]
    %v1068 = vld [vmem:[%s1054 + $0x68] sm:$0xff]
    %v1069 = vld [vmem:[%s1054 + $0x70] sm:$0xff]
    %v1070 = vld [vmem:[%s1054 + $0x78] sm:$0xff]
    %1071 = vmatprep.subr.mxu0 0.0
    %1072 = vmatpush1.msra.mxu0 %v1070
    %1073 = vmatprep.subr.mxu0 0.0
    %1074 = vmatpush1.msra.mxu0 %v1069
    %1075 = vmatprep.subr.mxu0 0.0
    %1076 = vmatpush1.msra.mxu0 %v1068
    %1077 = vmatprep.subr.mxu0 0.0
    %1078 = vmatpush1.msra.mxu0 %v1067
    %1079 = vmatprep.subr.mxu0 0.0
    %1080 = vmatpush1.msra.mxu0 %v1066
    %1081 = vmatprep.subr.mxu0 0.0
    %1082 = vmatpush1.msra.mxu0 %v1065
    %1083 = vmatprep.subr.mxu0 0.0
    %1084 = vmatpush1.msra.mxu0 %v1064
    %1085 = vmatprep.subr.mxu0 0.0
    %1086 = vmatpush1.msra.mxu0 %v1063
    %1087 = vmatprep.subr.mxu0 0.0
    %1088 = vmatpush1.msra.mxu0 %v1062
    %1089 = vmatprep.subr.mxu0 0.0
    %1090 = vmatpush1.msra.mxu0 %v1061
    %1091 = vmatprep.subr.mxu0 0.0
    %1092 = vmatpush1.msra.mxu0 %v1060
    %1093 = vmatprep.subr.mxu0 0.0
    %1094 = vmatpush1.msra.mxu0 %v1059
    %1095 = vmatprep.subr.mxu0 0.0
    %1096 = vmatpush1.msra.mxu0 %v1058
    %1097 = vmatprep.subr.mxu0 0.0
    %1098 = vmatpush1.msra.mxu0 %v1057
    %1099 = vmatprep.subr.mxu0 0.0
    %1100 = vmatpush1.msra.mxu0 %v1056
    %1101 = vmatprep.subr.mxu0 0.0
    %1102 = vmatpush1.msra.mxu0 %v1055
    %1103 = vmatprep.subr.mxu0 0.0
    %1104 = vmatpush2.msra.mxu0 0.0
    %1105 = vmatprep.subr.mxu0 0.0
    %1106 = vmatpush2.msra.mxu0 0.0
    %1107 = vmatprep.subr.mxu0 0.0
    %1108 = vmatpush2.msra.mxu0 0.0
    %1109 = vmatprep.subr.mxu0 0.0
    %1110 = vmatpush2.msra.mxu0 0.0
    %1111 = vmatprep.subr.mxu0 0.0
    %1112 = vmatpush2.msra.mxu0 0.0
    %1113 = vmatprep.subr.mxu0 0.0
    %1114 = vmatpush2.msra.mxu0 0.0
    %1115 = vmatprep.subr.mxu0 0.0
    %1116 = vmatpush2.msra.mxu0 0.0
    %1117 = vmatprep.subr.mxu0 0.0
    %1118 = vmatpush2.msra.mxu0 0.0
    %1119 = vmatprep.subr.mxu0 0.0
    %1120 = vmatpush2.msra.mxu0 0.0
    %1121 = vmatprep.subr.mxu0 0.0
    %1122 = vmatpush2.msra.mxu0 0.0
    %1123 = vmatprep.subr.mxu0 0.0
    %1124 = vmatpush2.msra.mxu0 0.0
    %1125 = vmatprep.subr.mxu0 0.0
    %1126 = vmatpush2.msra.mxu0 0.0
    %1127 = vmatprep.subr.mxu0 0.0
    %1128 = vmatpush2.msra.mxu0 0.0
    %1129 = vmatprep.subr.mxu0 0.0
    %1130 = vmatpush2.msra.mxu0 0.0
    %1131 = vmatprep.subr.mxu0 0.0
    %1132 = vmatpush2.msra.mxu0 0.0
    %1133 = vmatprep.subr.mxu0 0.0
    %1134 = vmatpush2.msra.mxu0 0.0
    %1135 = vmatprep.mubr.f32.mxu0 0.0
    %1136 = vmatmul.mubr.f32.gmra.mxu0 %v1038
    %v1137 = vpop.f32.mrf.mxu0
    %v1138 = vadd.f32 0.0, %v1137
    %v1139 = vpop.f32.mrf.mxu0
    %1140 = vmatprep.mubr.f32.mxu0 0.0
    %1141 = vmatmul.mubr.f32.gmra.mxu0 %v1039
    %v1142 = vpop.f32.mrf.mxu0
    %v1143 = vadd.f32 0.0, %v1142
    %v1144 = vpop.f32.mrf.mxu0
    %1145 = vmatprep.mubr.f32.mxu0 0.0
    %1146 = vmatmul.mubr.f32.gmra.mxu0 %v1040
    %v1147 = vpop.f32.mrf.mxu0
    %v1148 = vadd.f32 0.0, %v1147
    %v1149 = vpop.f32.mrf.mxu0
    %1150 = vmatprep.mubr.f32.mxu0 0.0
    %1151 = vmatmul.mubr.f32.gmra.mxu0 %v1041
    %v1152 = vpop.f32.mrf.mxu0
    %v1153 = vadd.f32 0.0, %v1152
    %v1154 = vpop.f32.mrf.mxu0
    %1155 = vmatprep.mubr.f32.mxu0 0.0
    %1156 = vmatmul.mubr.f32.gmra.mxu0 %v1042
    %v1157 = vpop.f32.mrf.mxu0
    %v1158 = vadd.f32 0.0, %v1157
    %v1159 = vpop.f32.mrf.mxu0
    %1160 = vmatprep.mubr.f32.mxu0 0.0
    %1161 = vmatmul.mubr.f32.gmra.mxu0 %v1043
    %v1162 = vpop.f32.mrf.mxu0
    %v1163 = vadd.f32 0.0, %v1162
    %v1164 = vpop.f32.mrf.mxu0
    %1165 = vmatprep.mubr.f32.mxu0 0.0
    %1166 = vmatmul.mubr.f32.gmra.mxu0 %v1044
    %v1167 = vpop.f32.mrf.mxu0
    %v1168 = vadd.f32 0.0, %v1167
    %v1169 = vpop.f32.mrf.mxu0
    %1170 = vmatprep.mubr.f32.mxu0 0.0
    %1171 = vmatmul.mubr.f32.gmra.mxu0 %v1045
    %v1172 = vpop.f32.mrf.mxu0
    %v1173 = vadd.f32 0.0, %v1172
    %v1174 = vpop.f32.mrf.mxu0
    %1175 = vmatprep.mubr.f32.mxu0 0.0
    %1176 = vmatmul.mubr.f32.gmra.mxu0 %v1046
    %v1177 = vpop.f32.mrf.mxu0
    %v1178 = vadd.f32 0.0, %v1177
    %v1179 = vpop.f32.mrf.mxu0
    %1180 = vmatprep.mubr.f32.mxu0 0.0
    %1181 = vmatmul.mubr.f32.gmra.mxu0 %v1047
    %v1182 = vpop.f32.mrf.mxu0
    %v1183 = vadd.f32 0.0, %v1182
    %v1184 = vpop.f32.mrf.mxu0
    %1185 = vmatprep.mubr.f32.mxu0 0.0
    %1186 = vmatmul.mubr.f32.gmra.mxu0 %v1048
    %v1187 = vpop.f32.mrf.mxu0
    %v1188 = vadd.f32 0.0, %v1187
    %v1189 = vpop.f32.mrf.mxu0
    %1190 = vmatprep.mubr.f32.mxu0 0.0
    %1191 = vmatmul.mubr.f32.gmra.mxu0 %v1049
    %v1192 = vpop.f32.mrf.mxu0
    %v1193 = vadd.f32 0.0, %v1192
    %v1194 = vpop.f32.mrf.mxu0
    %1195 = vmatprep.mubr.f32.mxu0 0.0
    %1196 = vmatmul.mubr.f32.gmra.mxu0 %v1050
    %v1197 = vpop.f32.mrf.mxu0
    %v1198 = vadd.f32 0.0, %v1197
    %v1199 = vpop.f32.mrf.mxu0
    %1200 = vmatprep.mubr.f32.mxu0 0.0
    %1201 = vmatmul.mubr.f32.gmra.mxu0 %v1051
    %v1202 = vpop.f32.mrf.mxu0
    %v1203 = vadd.f32 0.0, %v1202
    %v1204 = vpop.f32.mrf.mxu0
    %1205 = vmatprep.mubr.f32.mxu0 0.0
    %1206 = vmatmul.mubr.f32.gmra.mxu0 %v1052
    %v1207 = vpop.f32.mrf.mxu0
    %v1208 = vadd.f32 0.0, %v1207
    %v1209 = vpop.f32.mrf.mxu0
    %1210 = vmatprep.mubr.f32.mxu0 0.0
    %1211 = vmatmul.mubr.f32.gmra.mxu0 %v1053
    %v1212 = vpop.f32.mrf.mxu0
    %v1213 = vadd.f32 0.0, %v1212
    %v1214 = vpop.f32.mrf.mxu0
    %1215 = vdwg.mxu0
    %s1216 = scalar_lea.vmem %s3, 3
    %v1217 = vld [vmem:[%s1216] sm:$0x1]
    %v1219 = vlaneseq
    %v1220 = vshrl.u32 %v1219, 7
    %v1221 = vsub.s32 0, %v1220
    %v1222 = vrot.slane %v1217, %v1221
    %1224 = vmatprep.subr.mxu0 0.0
    %1225 = vmatpush1.msra.mxu0 %v1213
    %1226 = vmatprep.subr.mxu0 0.0
    %1227 = vmatpush1.msra.mxu0 %v1208
    %1228 = vmatprep.subr.mxu0 0.0
    %1229 = vmatpush1.msra.mxu0 %v1203
    %1230 = vmatprep.subr.mxu0 0.0
    %1231 = vmatpush1.msra.mxu0 %v1198
    %1232 = vmatprep.subr.mxu0 0.0
    %1233 = vmatpush1.msra.mxu0 %v1193
    %1234 = vmatprep.subr.mxu0 0.0
    %1235 = vmatpush1.msra.mxu0 %v1188
    %1236 = vmatprep.subr.mxu0 0.0
    %1237 = vmatpush1.msra.mxu0 %v1183
    %1238 = vmatprep.subr.mxu0 0.0
    %1239 = vmatpush1.msra.mxu0 %v1178
    %1240 = vmatprep.subr.mxu0 0.0
    %1241 = vmatpush1.msra.mxu0 %v1173
    %1242 = vmatprep.subr.mxu0 0.0
    %1243 = vmatpush1.msra.mxu0 %v1168
    %1244 = vmatprep.subr.mxu0 0.0
    %1245 = vmatpush1.msra.mxu0 %v1163
    %1246 = vmatprep.subr.mxu0 0.0
    %1247 = vmatpush1.msra.mxu0 %v1158
    %1248 = vmatprep.subr.mxu0 0.0
    %1249 = vmatpush1.msra.mxu0 %v1153
    %1250 = vmatprep.subr.mxu0 0.0
    %1251 = vmatpush1.msra.mxu0 %v1148
    %1252 = vmatprep.subr.mxu0 0.0
    %1253 = vmatpush1.msra.mxu0 %v1143
    %1254 = vmatprep.subr.mxu0 0.0
    %1255 = vmatpush1.msra.mxu0 %v1138
    %1256 = vmatprep.subr.mxu0 0.0
    %1257 = vmatpush2.msra.mxu0 0.0
    %1258 = vmatprep.subr.mxu0 0.0
    %1259 = vmatpush2.msra.mxu0 0.0
    %1260 = vmatprep.subr.mxu0 0.0
    %1261 = vmatpush2.msra.mxu0 0.0
    %1262 = vmatprep.subr.mxu0 0.0
    %1263 = vmatpush2.msra.mxu0 0.0
    %1264 = vmatprep.subr.mxu0 0.0
    %1265 = vmatpush2.msra.mxu0 0.0
    %1266 = vmatprep.subr.mxu0 0.0
    %1267 = vmatpush2.msra.mxu0 0.0
    %1268 = vmatprep.subr.mxu0 0.0
    %1269 = vmatpush2.msra.mxu0 0.0
    %1270 = vmatprep.subr.mxu0 0.0
    %1271 = vmatpush2.msra.mxu0 0.0
    %1272 = vmatprep.subr.mxu0 0.0
    %1273 = vmatpush2.msra.mxu0 0.0
    %1274 = vmatprep.subr.mxu0 0.0
    %1275 = vmatpush2.msra.mxu0 0.0
    %1276 = vmatprep.subr.mxu0 0.0
    %1277 = vmatpush2.msra.mxu0 0.0
    %1278 = vmatprep.subr.mxu0 0.0
    %1279 = vmatpush2.msra.mxu0 0.0
    %1280 = vmatprep.subr.mxu0 0.0
    %1281 = vmatpush2.msra.mxu0 0.0
    %1282 = vmatprep.subr.mxu0 0.0
    %1283 = vmatpush2.msra.mxu0 0.0
    %1284 = vmatprep.subr.mxu0 0.0
    %1285 = vmatpush2.msra.mxu0 0.0
    %1286 = vmatprep.subr.mxu0 0.0
    %1287 = vmatpush2.msra.mxu0 0.0
    %1288 = vmatprep.mubr.f32.mxu0 0.0
    %1289 = vmatmul.mubr.f32.gmra.mxu0 %v31
    %v1290 = vpop.f32.mrf.mxu0
    %v1291 = vadd.f32 %v1222, %v1290
    %v1292 = vpop.f32.mrf.mxu0
    %1293 = vmatprep.mubr.f32.mxu0 0.0
    %1294 = vmatmul.mubr.f32.gmra.mxu0 %v32
    %v1295 = vpop.f32.mrf.mxu0
    %v1296 = vadd.f32 %v1222, %v1295
    %v1297 = vpop.f32.mrf.mxu0
    %1298 = vmatprep.mubr.f32.mxu0 0.0
    %1299 = vmatmul.mubr.f32.gmra.mxu0 %v33
    %v1300 = vpop.f32.mrf.mxu0
    %v1301 = vadd.f32 %v1222, %v1300
    %v1302 = vpop.f32.mrf.mxu0
    %1303 = vmatprep.mubr.f32.mxu0 0.0
    %1304 = vmatmul.mubr.f32.gmra.mxu0 %v34
    %v1305 = vpop.f32.mrf.mxu0
    %v1306 = vadd.f32 %v1222, %v1305
    %v1307 = vpop.f32.mrf.mxu0
    %1308 = vmatprep.mubr.f32.mxu0 0.0
    %1309 = vmatmul.mubr.f32.gmra.mxu0 %v35
    %v1310 = vpop.f32.mrf.mxu0
    %v1311 = vadd.f32 %v1222, %v1310
    %v1312 = vpop.f32.mrf.mxu0
    %1313 = vmatprep.mubr.f32.mxu0 0.0
    %1314 = vmatmul.mubr.f32.gmra.mxu0 %v36
    %v1315 = vpop.f32.mrf.mxu0
    %v1316 = vadd.f32 %v1222, %v1315
    %v1317 = vpop.f32.mrf.mxu0
    %1318 = vmatprep.mubr.f32.mxu0 0.0
    %1319 = vmatmul.mubr.f32.gmra.mxu0 %v37
    %v1320 = vpop.f32.mrf.mxu0
    %v1321 = vadd.f32 %v1222, %v1320
    %v1322 = vpop.f32.mrf.mxu0
    %1323 = vmatprep.mubr.f32.mxu0 0.0
    %1324 = vmatmul.mubr.f32.gmra.mxu0 %v38
    %v1325 = vpop.f32.mrf.mxu0
    %v1326 = vadd.f32 %v1222, %v1325
    %v1327 = vpop.f32.mrf.mxu0
    %1328 = vmatprep.mubr.f32.mxu0 0.0
    %1329 = vmatmul.mubr.f32.gmra.mxu0 %v39
    %v1330 = vpop.f32.mrf.mxu0
    %v1331 = vadd.f32 %v1222, %v1330
    %v1332 = vpop.f32.mrf.mxu0
    %1333 = vmatprep.mubr.f32.mxu0 0.0
    %1334 = vmatmul.mubr.f32.gmra.mxu0 %v40
    %v1335 = vpop.f32.mrf.mxu0
    %v1336 = vadd.f32 %v1222, %v1335
    %v1337 = vpop.f32.mrf.mxu0
    %1338 = vmatprep.mubr.f32.mxu0 0.0
    %1339 = vmatmul.mubr.f32.gmra.mxu0 %v41
    %v1340 = vpop.f32.mrf.mxu0
    %v1341 = vadd.f32 %v1222, %v1340
    %v1342 = vpop.f32.mrf.mxu0
    %1343 = vmatprep.mubr.f32.mxu0 0.0
    %1344 = vmatmul.mubr.f32.gmra.mxu0 %v42
    %v1345 = vpop.f32.mrf.mxu0
    %v1346 = vadd.f32 %v1222, %v1345
    %v1347 = vpop.f32.mrf.mxu0
    %1348 = vmatprep.mubr.f32.mxu0 0.0
    %1349 = vmatmul.mubr.f32.gmra.mxu0 %v43
    %v1350 = vpop.f32.mrf.mxu0
    %v1351 = vadd.f32 %v1222, %v1350
    %v1352 = vpop.f32.mrf.mxu0
    %1353 = vmatprep.mubr.f32.mxu0 0.0
    %1354 = vmatmul.mubr.f32.gmra.mxu0 %v44
    %v1355 = vpop.f32.mrf.mxu0
    %v1356 = vadd.f32 %v1222, %v1355
    %v1357 = vpop.f32.mrf.mxu0
    %1358 = vmatprep.mubr.f32.mxu0 0.0
    %1359 = vmatmul.mubr.f32.gmra.mxu0 %v45
    %v1360 = vpop.f32.mrf.mxu0
    %v1361 = vadd.f32 %v1222, %v1360
    %v1362 = vpop.f32.mrf.mxu0
    %1363 = vmatprep.mubr.f32.mxu0 0.0
    %1364 = vmatmul.mubr.f32.gmra.mxu0 %v46
    %v1365 = vpop.f32.mrf.mxu0
    %v1366 = vadd.f32 %v1222, %v1365
    %v1367 = vpop.f32.mrf.mxu0
    %1368 = vdwg.mxu0
    %v1369 = vmax.f32 %v1291, 0.0
    %v1370 = vmax.f32 %v1296, 0.0
    %v1371 = vmax.f32 %v1301, 0.0
    %v1372 = vmax.f32 %v1306, 0.0
    %v1373 = vmax.f32 %v1311, 0.0
    %v1374 = vmax.f32 %v1316, 0.0
    %v1375 = vmax.f32 %v1321, 0.0
    %v1376 = vmax.f32 %v1326, 0.0
    %v1377 = vmax.f32 %v1331, 0.0
    %v1378 = vmax.f32 %v1336, 0.0
    %v1379 = vmax.f32 %v1341, 0.0
    %v1380 = vmax.f32 %v1346, 0.0
    %v1381 = vmax.f32 %v1351, 0.0
    %v1382 = vmax.f32 %v1356, 0.0
    %v1383 = vmax.f32 %v1361, 0.0
    %v1384 = vmax.f32 %v1366, 0.0
    %s1385 = scalar_lea.vmem [#allocation2], 512
    %v1386 = vld [vmem:[%s1385] sm:$0xff]
    %v1387 = vld [vmem:[%s1385 + $0x8] sm:$0xff]
    %v1388 = vld [vmem:[%s1385 + $0x10] sm:$0xff]
    %v1389 = vld [vmem:[%s1385 + $0x18] sm:$0xff]
    %v1390 = vld [vmem:[%s1385 + $0x20] sm:$0xff]
    %v1391 = vld [vmem:[%s1385 + $0x28] sm:$0xff]
    %v1392 = vld [vmem:[%s1385 + $0x30] sm:$0xff]
    %v1393 = vld [vmem:[%s1385 + $0x38] sm:$0xff]
    %v1394 = vld [vmem:[%s1385 + $0x40] sm:$0xff]
    %v1395 = vld [vmem:[%s1385 + $0x48] sm:$0xff]
    %v1396 = vld [vmem:[%s1385 + $0x50] sm:$0xff]
    %v1397 = vld [vmem:[%s1385 + $0x58] sm:$0xff]
    %v1398 = vld [vmem:[%s1385 + $0x60] sm:$0xff]
    %v1399 = vld [vmem:[%s1385 + $0x68] sm:$0xff]
    %v1400 = vld [vmem:[%s1385 + $0x70] sm:$0xff]
    %v1401 = vld [vmem:[%s1385 + $0x78] sm:$0xff]
    %1402 = vmatprep.subr.mxu0 0.0
    %1403 = vmatpush1.msra.mxu0 %v1401
    %1404 = vmatprep.subr.mxu0 0.0
    %1405 = vmatpush1.msra.mxu0 %v1400
    %1406 = vmatprep.subr.mxu0 0.0
    %1407 = vmatpush1.msra.mxu0 %v1399
    %1408 = vmatprep.subr.mxu0 0.0
    %1409 = vmatpush1.msra.mxu0 %v1398
    %1410 = vmatprep.subr.mxu0 0.0
    %1411 = vmatpush1.msra.mxu0 %v1397
    %1412 = vmatprep.subr.mxu0 0.0
    %1413 = vmatpush1.msra.mxu0 %v1396
    %1414 = vmatprep.subr.mxu0 0.0
    %1415 = vmatpush1.msra.mxu0 %v1395
    %1416 = vmatprep.subr.mxu0 0.0
    %1417 = vmatpush1.msra.mxu0 %v1394
    %1418 = vmatprep.subr.mxu0 0.0
    %1419 = vmatpush1.msra.mxu0 %v1393
    %1420 = vmatprep.subr.mxu0 0.0
    %1421 = vmatpush1.msra.mxu0 %v1392
    %1422 = vmatprep.subr.mxu0 0.0
    %1423 = vmatpush1.msra.mxu0 %v1391
    %1424 = vmatprep.subr.mxu0 0.0
    %1425 = vmatpush1.msra.mxu0 %v1390
    %1426 = vmatprep.subr.mxu0 0.0
    %1427 = vmatpush1.msra.mxu0 %v1389
    %1428 = vmatprep.subr.mxu0 0.0
    %1429 = vmatpush1.msra.mxu0 %v1388
    %1430 = vmatprep.subr.mxu0 0.0
    %1431 = vmatpush1.msra.mxu0 %v1387
    %1432 = vmatprep.subr.mxu0 0.0
    %1433 = vmatpush1.msra.mxu0 %v1386
    %1434 = vmatprep.subr.mxu0 0.0
    %1435 = vmatpush2.msra.mxu0 0.0
    %1436 = vmatprep.subr.mxu0 0.0
    %1437 = vmatpush2.msra.mxu0 0.0
    %1438 = vmatprep.subr.mxu0 0.0
    %1439 = vmatpush2.msra.mxu0 0.0
    %1440 = vmatprep.subr.mxu0 0.0
    %1441 = vmatpush2.msra.mxu0 0.0
    %1442 = vmatprep.subr.mxu0 0.0
    %1443 = vmatpush2.msra.mxu0 0.0
    %1444 = vmatprep.subr.mxu0 0.0
    %1445 = vmatpush2.msra.mxu0 0.0
    %1446 = vmatprep.subr.mxu0 0.0
    %1447 = vmatpush2.msra.mxu0 0.0
    %1448 = vmatprep.subr.mxu0 0.0
    %1449 = vmatpush2.msra.mxu0 0.0
    %1450 = vmatprep.subr.mxu0 0.0
    %1451 = vmatpush2.msra.mxu0 0.0
    %1452 = vmatprep.subr.mxu0 0.0
    %1453 = vmatpush2.msra.mxu0 0.0
    %1454 = vmatprep.subr.mxu0 0.0
    %1455 = vmatpush2.msra.mxu0 0.0
    %1456 = vmatprep.subr.mxu0 0.0
    %1457 = vmatpush2.msra.mxu0 0.0
    %1458 = vmatprep.subr.mxu0 0.0
    %1459 = vmatpush2.msra.mxu0 0.0
    %1460 = vmatprep.subr.mxu0 0.0
    %1461 = vmatpush2.msra.mxu0 0.0
    %1462 = vmatprep.subr.mxu0 0.0
    %1463 = vmatpush2.msra.mxu0 0.0
    %1464 = vmatprep.subr.mxu0 0.0
    %1465 = vmatpush2.msra.mxu0 0.0
    %1466 = vmatprep.mubr.f32.mxu0 0.0
    %1467 = vmatmul.mubr.f32.gmra.mxu0 %v1369
    %v1468 = vpop.f32.mrf.mxu0
    %v1469 = vadd.f32 0.0, %v1468
    %v1470 = vpop.f32.mrf.mxu0
    %1471 = vmatprep.mubr.f32.mxu0 0.0
    %1472 = vmatmul.mubr.f32.gmra.mxu0 %v1370
    %v1473 = vpop.f32.mrf.mxu0
    %v1474 = vadd.f32 0.0, %v1473
    %v1475 = vpop.f32.mrf.mxu0
    %1476 = vmatprep.mubr.f32.mxu0 0.0
    %1477 = vmatmul.mubr.f32.gmra.mxu0 %v1371
    %v1478 = vpop.f32.mrf.mxu0
    %v1479 = vadd.f32 0.0, %v1478
    %v1480 = vpop.f32.mrf.mxu0
    %1481 = vmatprep.mubr.f32.mxu0 0.0
    %1482 = vmatmul.mubr.f32.gmra.mxu0 %v1372
    %v1483 = vpop.f32.mrf.mxu0
    %v1484 = vadd.f32 0.0, %v1483
    %v1485 = vpop.f32.mrf.mxu0
    %1486 = vmatprep.mubr.f32.mxu0 0.0
    %1487 = vmatmul.mubr.f32.gmra.mxu0 %v1373
    %v1488 = vpop.f32.mrf.mxu0
    %v1489 = vadd.f32 0.0, %v1488
    %v1490 = vpop.f32.mrf.mxu0
    %1491 = vmatprep.mubr.f32.mxu0 0.0
    %1492 = vmatmul.mubr.f32.gmra.mxu0 %v1374
    %v1493 = vpop.f32.mrf.mxu0
    %v1494 = vadd.f32 0.0, %v1493
    %v1495 = vpop.f32.mrf.mxu0
    %1496 = vmatprep.mubr.f32.mxu0 0.0
    %1497 = vmatmul.mubr.f32.gmra.mxu0 %v1375
    %v1498 = vpop.f32.mrf.mxu0
    %v1499 = vadd.f32 0.0, %v1498
    %v1500 = vpop.f32.mrf.mxu0
    %1501 = vmatprep.mubr.f32.mxu0 0.0
    %1502 = vmatmul.mubr.f32.gmra.mxu0 %v1376
    %v1503 = vpop.f32.mrf.mxu0
    %v1504 = vadd.f32 0.0, %v1503
    %v1505 = vpop.f32.mrf.mxu0
    %1506 = vmatprep.mubr.f32.mxu0 0.0
    %1507 = vmatmul.mubr.f32.gmra.mxu0 %v1377
    %v1508 = vpop.f32.mrf.mxu0
    %v1509 = vadd.f32 0.0, %v1508
    %v1510 = vpop.f32.mrf.mxu0
    %1511 = vmatprep.mubr.f32.mxu0 0.0
    %1512 = vmatmul.mubr.f32.gmra.mxu0 %v1378
    %v1513 = vpop.f32.mrf.mxu0
    %v1514 = vadd.f32 0.0, %v1513
    %v1515 = vpop.f32.mrf.mxu0
    %1516 = vmatprep.mubr.f32.mxu0 0.0
    %1517 = vmatmul.mubr.f32.gmra.mxu0 %v1379
    %v1518 = vpop.f32.mrf.mxu0
    %v1519 = vadd.f32 0.0, %v1518
    %v1520 = vpop.f32.mrf.mxu0
    %1521 = vmatprep.mubr.f32.mxu0 0.0
    %1522 = vmatmul.mubr.f32.gmra.mxu0 %v1380
    %v1523 = vpop.f32.mrf.mxu0
    %v1524 = vadd.f32 0.0, %v1523
    %v1525 = vpop.f32.mrf.mxu0
    %1526 = vmatprep.mubr.f32.mxu0 0.0
    %1527 = vmatmul.mubr.f32.gmra.mxu0 %v1381
    %v1528 = vpop.f32.mrf.mxu0
    %v1529 = vadd.f32 0.0, %v1528
    %v1530 = vpop.f32.mrf.mxu0
    %1531 = vmatprep.mubr.f32.mxu0 0.0
    %1532 = vmatmul.mubr.f32.gmra.mxu0 %v1382
    %v1533 = vpop.f32.mrf.mxu0
    %v1534 = vadd.f32 0.0, %v1533
    %v1535 = vpop.f32.mrf.mxu0
    %1536 = vmatprep.mubr.f32.mxu0 0.0
    %1537 = vmatmul.mubr.f32.gmra.mxu0 %v1383
    %v1538 = vpop.f32.mrf.mxu0
    %v1539 = vadd.f32 0.0, %v1538
    %v1540 = vpop.f32.mrf.mxu0
    %1541 = vmatprep.mubr.f32.mxu0 0.0
    %1542 = vmatmul.mubr.f32.gmra.mxu0 %v1384
    %v1543 = vpop.f32.mrf.mxu0
    %v1544 = vadd.f32 0.0, %v1543
    %v1545 = vpop.f32.mrf.mxu0
    %1546 = vdwg.mxu0
    %s1547 = scalar_lea.vmem %s3, 4
    %v1548 = vld [vmem:[%s1547] sm:$0x1]
    %v1550 = vlaneseq
    %v1551 = vshrl.u32 %v1550, 7
    %v1552 = vsub.s32 0, %v1551
    %v1553 = vrot.slane %v1548, %v1552
    %1555 = vmatprep.subr.mxu0 0.0
    %1556 = vmatpush1.msra.mxu0 %v1544
    %1557 = vmatprep.subr.mxu0 0.0
    %1558 = vmatpush1.msra.mxu0 %v1539
    %1559 = vmatprep.subr.mxu0 0.0
    %1560 = vmatpush1.msra.mxu0 %v1534
    %1561 = vmatprep.subr.mxu0 0.0
    %1562 = vmatpush1.msra.mxu0 %v1529
    %1563 = vmatprep.subr.mxu0 0.0
    %1564 = vmatpush1.msra.mxu0 %v1524
    %1565 = vmatprep.subr.mxu0 0.0
    %1566 = vmatpush1.msra.mxu0 %v1519
    %1567 = vmatprep.subr.mxu0 0.0
    %1568 = vmatpush1.msra.mxu0 %v1514
    %1569 = vmatprep.subr.mxu0 0.0
    %1570 = vmatpush1.msra.mxu0 %v1509
    %1571 = vmatprep.subr.mxu0 0.0
    %1572 = vmatpush1.msra.mxu0 %v1504
    %1573 = vmatprep.subr.mxu0 0.0
    %1574 = vmatpush1.msra.mxu0 %v1499
    %1575 = vmatprep.subr.mxu0 0.0
    %1576 = vmatpush1.msra.mxu0 %v1494
    %1577 = vmatprep.subr.mxu0 0.0
    %1578 = vmatpush1.msra.mxu0 %v1489
    %1579 = vmatprep.subr.mxu0 0.0
    %1580 = vmatpush1.msra.mxu0 %v1484
    %1581 = vmatprep.subr.mxu0 0.0
    %1582 = vmatpush1.msra.mxu0 %v1479
    %1583 = vmatprep.subr.mxu0 0.0
    %1584 = vmatpush1.msra.mxu0 %v1474
    %1585 = vmatprep.subr.mxu0 0.0
    %1586 = vmatpush1.msra.mxu0 %v1469
    %1587 = vmatprep.subr.mxu0 0.0
    %1588 = vmatpush2.msra.mxu0 0.0
    %1589 = vmatprep.subr.mxu0 0.0
    %1590 = vmatpush2.msra.mxu0 0.0
    %1591 = vmatprep.subr.mxu0 0.0
    %1592 = vmatpush2.msra.mxu0 0.0
    %1593 = vmatprep.subr.mxu0 0.0
    %1594 = vmatpush2.msra.mxu0 0.0
    %1595 = vmatprep.subr.mxu0 0.0
    %1596 = vmatpush2.msra.mxu0 0.0
    %1597 = vmatprep.subr.mxu0 0.0
    %1598 = vmatpush2.msra.mxu0 0.0
    %1599 = vmatprep.subr.mxu0 0.0
    %1600 = vmatpush2.msra.mxu0 0.0
    %1601 = vmatprep.subr.mxu0 0.0
    %1602 = vmatpush2.msra.mxu0 0.0
    %1603 = vmatprep.subr.mxu0 0.0
    %1604 = vmatpush2.msra.mxu0 0.0
    %1605 = vmatprep.subr.mxu0 0.0
    %1606 = vmatpush2.msra.mxu0 0.0
    %1607 = vmatprep.subr.mxu0 0.0
    %1608 = vmatpush2.msra.mxu0 0.0
    %1609 = vmatprep.subr.mxu0 0.0
    %1610 = vmatpush2.msra.mxu0 0.0
    %1611 = vmatprep.subr.mxu0 0.0
    %1612 = vmatpush2.msra.mxu0 0.0
    %1613 = vmatprep.subr.mxu0 0.0
    %1614 = vmatpush2.msra.mxu0 0.0
    %1615 = vmatprep.subr.mxu0 0.0
    %1616 = vmatpush2.msra.mxu0 0.0
    %1617 = vmatprep.subr.mxu0 0.0
    %1618 = vmatpush2.msra.mxu0 0.0
    %1619 = vmatprep.mubr.f32.mxu0 0.0
    %1620 = vmatmul.mubr.f32.gmra.mxu0 %v31
    %v1621 = vpop.f32.mrf.mxu0
    %v1622 = vadd.f32 %v1553, %v1621
    %v1623 = vpop.f32.mrf.mxu0
    %1624 = vmatprep.mubr.f32.mxu0 0.0
    %1625 = vmatmul.mubr.f32.gmra.mxu0 %v32
    %v1626 = vpop.f32.mrf.mxu0
    %v1627 = vadd.f32 %v1553, %v1626
    %v1628 = vpop.f32.mrf.mxu0
    %1629 = vmatprep.mubr.f32.mxu0 0.0
    %1630 = vmatmul.mubr.f32.gmra.mxu0 %v33
    %v1631 = vpop.f32.mrf.mxu0
    %v1632 = vadd.f32 %v1553, %v1631
    %v1633 = vpop.f32.mrf.mxu0
    %1634 = vmatprep.mubr.f32.mxu0 0.0
    %1635 = vmatmul.mubr.f32.gmra.mxu0 %v34
    %v1636 = vpop.f32.mrf.mxu0
    %v1637 = vadd.f32 %v1553, %v1636
    %v1638 = vpop.f32.mrf.mxu0
    %1639 = vmatprep.mubr.f32.mxu0 0.0
    %1640 = vmatmul.mubr.f32.gmra.mxu0 %v35
    %v1641 = vpop.f32.mrf.mxu0
    %v1642 = vadd.f32 %v1553, %v1641
    %v1643 = vpop.f32.mrf.mxu0
    %1644 = vmatprep.mubr.f32.mxu0 0.0
    %1645 = vmatmul.mubr.f32.gmra.mxu0 %v36
    %v1646 = vpop.f32.mrf.mxu0
    %v1647 = vadd.f32 %v1553, %v1646
    %v1648 = vpop.f32.mrf.mxu0
    %1649 = vmatprep.mubr.f32.mxu0 0.0
    %1650 = vmatmul.mubr.f32.gmra.mxu0 %v37
    %v1651 = vpop.f32.mrf.mxu0
    %v1652 = vadd.f32 %v1553, %v1651
    %v1653 = vpop.f32.mrf.mxu0
    %1654 = vmatprep.mubr.f32.mxu0 0.0
    %1655 = vmatmul.mubr.f32.gmra.mxu0 %v38
    %v1656 = vpop.f32.mrf.mxu0
    %v1657 = vadd.f32 %v1553, %v1656
    %v1658 = vpop.f32.mrf.mxu0
    %1659 = vmatprep.mubr.f32.mxu0 0.0
    %1660 = vmatmul.mubr.f32.gmra.mxu0 %v39
    %v1661 = vpop.f32.mrf.mxu0
    %v1662 = vadd.f32 %v1553, %v1661
    %v1663 = vpop.f32.mrf.mxu0
    %1664 = vmatprep.mubr.f32.mxu0 0.0
    %1665 = vmatmul.mubr.f32.gmra.mxu0 %v40
    %v1666 = vpop.f32.mrf.mxu0
    %v1667 = vadd.f32 %v1553, %v1666
    %v1668 = vpop.f32.mrf.mxu0
    %1669 = vmatprep.mubr.f32.mxu0 0.0
    %1670 = vmatmul.mubr.f32.gmra.mxu0 %v41
    %v1671 = vpop.f32.mrf.mxu0
    %v1672 = vadd.f32 %v1553, %v1671
    %v1673 = vpop.f32.mrf.mxu0
    %1674 = vmatprep.mubr.f32.mxu0 0.0
    %1675 = vmatmul.mubr.f32.gmra.mxu0 %v42
    %v1676 = vpop.f32.mrf.mxu0
    %v1677 = vadd.f32 %v1553, %v1676
    %v1678 = vpop.f32.mrf.mxu0
    %1679 = vmatprep.mubr.f32.mxu0 0.0
    %1680 = vmatmul.mubr.f32.gmra.mxu0 %v43
    %v1681 = vpop.f32.mrf.mxu0
    %v1682 = vadd.f32 %v1553, %v1681
    %v1683 = vpop.f32.mrf.mxu0
    %1684 = vmatprep.mubr.f32.mxu0 0.0
    %1685 = vmatmul.mubr.f32.gmra.mxu0 %v44
    %v1686 = vpop.f32.mrf.mxu0
    %v1687 = vadd.f32 %v1553, %v1686
    %v1688 = vpop.f32.mrf.mxu0
    %1689 = vmatprep.mubr.f32.mxu0 0.0
    %1690 = vmatmul.mubr.f32.gmra.mxu0 %v45
    %v1691 = vpop.f32.mrf.mxu0
    %v1692 = vadd.f32 %v1553, %v1691
    %v1693 = vpop.f32.mrf.mxu0
    %1694 = vmatprep.mubr.f32.mxu0 0.0
    %1695 = vmatmul.mubr.f32.gmra.mxu0 %v46
    %v1696 = vpop.f32.mrf.mxu0
    %v1697 = vadd.f32 %v1553, %v1696
    %v1698 = vpop.f32.mrf.mxu0
    %1699 = vdwg.mxu0
    %v1700 = vmax.f32 %v1622, 0.0
    %v1701 = vmax.f32 %v1627, 0.0
    %v1702 = vmax.f32 %v1632, 0.0
    %v1703 = vmax.f32 %v1637, 0.0
    %v1704 = vmax.f32 %v1642, 0.0
    %v1705 = vmax.f32 %v1647, 0.0
    %v1706 = vmax.f32 %v1652, 0.0
    %v1707 = vmax.f32 %v1657, 0.0
    %v1708 = vmax.f32 %v1662, 0.0
    %v1709 = vmax.f32 %v1667, 0.0
    %v1710 = vmax.f32 %v1672, 0.0
    %v1711 = vmax.f32 %v1677, 0.0
    %v1712 = vmax.f32 %v1682, 0.0
    %v1713 = vmax.f32 %v1687, 0.0
    %v1714 = vmax.f32 %v1692, 0.0
    %v1715 = vmax.f32 %v1697, 0.0
    %s1716 = scalar_lea.vmem [#allocation2], 640
    %v1717 = vld [vmem:[%s1716] sm:$0xff]
    %v1718 = vld [vmem:[%s1716 + $0x8] sm:$0xff]
    %v1719 = vld [vmem:[%s1716 + $0x10] sm:$0xff]
    %v1720 = vld [vmem:[%s1716 + $0x18] sm:$0xff]
    %v1721 = vld [vmem:[%s1716 + $0x20] sm:$0xff]
    %v1722 = vld [vmem:[%s1716 + $0x28] sm:$0xff]
    %v1723 = vld [vmem:[%s1716 + $0x30] sm:$0xff]
    %v1724 = vld [vmem:[%s1716 + $0x38] sm:$0xff]
    %v1725 = vld [vmem:[%s1716 + $0x40] sm:$0xff]
    %v1726 = vld [vmem:[%s1716 + $0x48] sm:$0xff]
    %v1727 = vld [vmem:[%s1716 + $0x50] sm:$0xff]
    %v1728 = vld [vmem:[%s1716 + $0x58] sm:$0xff]
    %v1729 = vld [vmem:[%s1716 + $0x60] sm:$0xff]
    %v1730 = vld [vmem:[%s1716 + $0x68] sm:$0xff]
    %v1731 = vld [vmem:[%s1716 + $0x70] sm:$0xff]
    %v1732 = vld [vmem:[%s1716 + $0x78] sm:$0xff]
    %s1733 = scalar_lea.vmem %s3, 5
    %v1734 = vld [vmem:[%s1733] sm:$0x1]
    %v1736 = vlaneseq
    %v1737 = vshrl.u32 %v1736, 7
    %v1738 = vsub.s32 0, %v1737
    %v1739 = vrot.slane %v1734, %v1738
    %1741 = vmatprep.subr.mxu0 0.0
    %1742 = vmatpush1.msra.mxu0 %v1732
    %1743 = vmatprep.subr.mxu0 0.0
    %1744 = vmatpush1.msra.mxu0 %v1731
    %1745 = vmatprep.subr.mxu0 0.0
    %1746 = vmatpush1.msra.mxu0 %v1730
    %1747 = vmatprep.subr.mxu0 0.0
    %1748 = vmatpush1.msra.mxu0 %v1729
    %1749 = vmatprep.subr.mxu0 0.0
    %1750 = vmatpush1.msra.mxu0 %v1728
    %1751 = vmatprep.subr.mxu0 0.0
    %1752 = vmatpush1.msra.mxu0 %v1727
    %1753 = vmatprep.subr.mxu0 0.0
    %1754 = vmatpush1.msra.mxu0 %v1726
    %1755 = vmatprep.subr.mxu0 0.0
    %1756 = vmatpush1.msra.mxu0 %v1725
    %1757 = vmatprep.subr.mxu0 0.0
    %1758 = vmatpush1.msra.mxu0 %v1724
    %1759 = vmatprep.subr.mxu0 0.0
    %1760 = vmatpush1.msra.mxu0 %v1723
    %1761 = vmatprep.subr.mxu0 0.0
    %1762 = vmatpush1.msra.mxu0 %v1722
    %1763 = vmatprep.subr.mxu0 0.0
    %1764 = vmatpush1.msra.mxu0 %v1721
    %1765 = vmatprep.subr.mxu0 0.0
    %1766 = vmatpush1.msra.mxu0 %v1720
    %1767 = vmatprep.subr.mxu0 0.0
    %1768 = vmatpush1.msra.mxu0 %v1719
    %1769 = vmatprep.subr.mxu0 0.0
    %1770 = vmatpush1.msra.mxu0 %v1718
    %1771 = vmatprep.subr.mxu0 0.0
    %1772 = vmatpush1.msra.mxu0 %v1717
    %1773 = vmatprep.subr.mxu0 0.0
    %1774 = vmatpush2.msra.mxu0 0.0
    %1775 = vmatprep.subr.mxu0 0.0
    %1776 = vmatpush2.msra.mxu0 0.0
    %1777 = vmatprep.subr.mxu0 0.0
    %1778 = vmatpush2.msra.mxu0 0.0
    %1779 = vmatprep.subr.mxu0 0.0
    %1780 = vmatpush2.msra.mxu0 0.0
    %1781 = vmatprep.subr.mxu0 0.0
    %1782 = vmatpush2.msra.mxu0 0.0
    %1783 = vmatprep.subr.mxu0 0.0
    %1784 = vmatpush2.msra.mxu0 0.0
    %1785 = vmatprep.subr.mxu0 0.0
    %1786 = vmatpush2.msra.mxu0 0.0
    %1787 = vmatprep.subr.mxu0 0.0
    %1788 = vmatpush2.msra.mxu0 0.0
    %1789 = vmatprep.subr.mxu0 0.0
    %1790 = vmatpush2.msra.mxu0 0.0
    %1791 = vmatprep.subr.mxu0 0.0
    %1792 = vmatpush2.msra.mxu0 0.0
    %1793 = vmatprep.subr.mxu0 0.0
    %1794 = vmatpush2.msra.mxu0 0.0
    %1795 = vmatprep.subr.mxu0 0.0
    %1796 = vmatpush2.msra.mxu0 0.0
    %1797 = vmatprep.subr.mxu0 0.0
    %1798 = vmatpush2.msra.mxu0 0.0
    %1799 = vmatprep.subr.mxu0 0.0
    %1800 = vmatpush2.msra.mxu0 0.0
    %1801 = vmatprep.subr.mxu0 0.0
    %1802 = vmatpush2.msra.mxu0 0.0
    %1803 = vmatprep.subr.mxu0 0.0
    %1804 = vmatpush2.msra.mxu0 0.0
    %1805 = vmatprep.mubr.f32.mxu0 0.0
    %1806 = vmatmul.mubr.f32.gmra.mxu0 %v1700
    %v1807 = vpop.f32.mrf.mxu0
    %v1808 = vadd.f32 %v1739, %v1807
    %v1809 = vpop.f32.mrf.mxu0
    %1810 = vmatprep.mubr.f32.mxu0 0.0
    %1811 = vmatmul.mubr.f32.gmra.mxu0 %v1701
    %v1812 = vpop.f32.mrf.mxu0
    %v1813 = vadd.f32 %v1739, %v1812
    %v1814 = vpop.f32.mrf.mxu0
    %1815 = vmatprep.mubr.f32.mxu0 0.0
    %1816 = vmatmul.mubr.f32.gmra.mxu0 %v1702
    %v1817 = vpop.f32.mrf.mxu0
    %v1818 = vadd.f32 %v1739, %v1817
    %v1819 = vpop.f32.mrf.mxu0
    %1820 = vmatprep.mubr.f32.mxu0 0.0
    %1821 = vmatmul.mubr.f32.gmra.mxu0 %v1703
    %v1822 = vpop.f32.mrf.mxu0
    %v1823 = vadd.f32 %v1739, %v1822
    %v1824 = vpop.f32.mrf.mxu0
    %1825 = vmatprep.mubr.f32.mxu0 0.0
    %1826 = vmatmul.mubr.f32.gmra.mxu0 %v1704
    %v1827 = vpop.f32.mrf.mxu0
    %v1828 = vadd.f32 %v1739, %v1827
    %v1829 = vpop.f32.mrf.mxu0
    %1830 = vmatprep.mubr.f32.mxu0 0.0
    %1831 = vmatmul.mubr.f32.gmra.mxu0 %v1705
    %v1832 = vpop.f32.mrf.mxu0
    %v1833 = vadd.f32 %v1739, %v1832
    %v1834 = vpop.f32.mrf.mxu0
    %1835 = vmatprep.mubr.f32.mxu0 0.0
    %1836 = vmatmul.mubr.f32.gmra.mxu0 %v1706
    %v1837 = vpop.f32.mrf.mxu0
    %v1838 = vadd.f32 %v1739, %v1837
    %v1839 = vpop.f32.mrf.mxu0
    %1840 = vmatprep.mubr.f32.mxu0 0.0
    %1841 = vmatmul.mubr.f32.gmra.mxu0 %v1707
    %v1842 = vpop.f32.mrf.mxu0
    %v1843 = vadd.f32 %v1739, %v1842
    %v1844 = vpop.f32.mrf.mxu0
    %1845 = vmatprep.mubr.f32.mxu0 0.0
    %1846 = vmatmul.mubr.f32.gmra.mxu0 %v1708
    %v1847 = vpop.f32.mrf.mxu0
    %v1848 = vadd.f32 %v1739, %v1847
    %v1849 = vpop.f32.mrf.mxu0
    %1850 = vmatprep.mubr.f32.mxu0 0.0
    %1851 = vmatmul.mubr.f32.gmra.mxu0 %v1709
    %v1852 = vpop.f32.mrf.mxu0
    %v1853 = vadd.f32 %v1739, %v1852
    %v1854 = vpop.f32.mrf.mxu0
    %1855 = vmatprep.mubr.f32.mxu0 0.0
    %1856 = vmatmul.mubr.f32.gmra.mxu0 %v1710
    %v1857 = vpop.f32.mrf.mxu0
    %v1858 = vadd.f32 %v1739, %v1857
    %v1859 = vpop.f32.mrf.mxu0
    %1860 = vmatprep.mubr.f32.mxu0 0.0
    %1861 = vmatmul.mubr.f32.gmra.mxu0 %v1711
    %v1862 = vpop.f32.mrf.mxu0
    %v1863 = vadd.f32 %v1739, %v1862
    %v1864 = vpop.f32.mrf.mxu0
    %1865 = vmatprep.mubr.f32.mxu0 0.0
    %1866 = vmatmul.mubr.f32.gmra.mxu0 %v1712
    %v1867 = vpop.f32.mrf.mxu0
    %v1868 = vadd.f32 %v1739, %v1867
    %v1869 = vpop.f32.mrf.mxu0
    %1870 = vmatprep.mubr.f32.mxu0 0.0
    %1871 = vmatmul.mubr.f32.gmra.mxu0 %v1713
    %v1872 = vpop.f32.mrf.mxu0
    %v1873 = vadd.f32 %v1739, %v1872
    %v1874 = vpop.f32.mrf.mxu0
    %1875 = vmatprep.mubr.f32.mxu0 0.0
    %1876 = vmatmul.mubr.f32.gmra.mxu0 %v1714
    %v1877 = vpop.f32.mrf.mxu0
    %v1878 = vadd.f32 %v1739, %v1877
    %v1879 = vpop.f32.mrf.mxu0
    %1880 = vmatprep.mubr.f32.mxu0 0.0
    %1881 = vmatmul.mubr.f32.gmra.mxu0 %v1715
    %v1882 = vpop.f32.mrf.mxu0
    %v1883 = vadd.f32 %v1739, %v1882
    %v1884 = vpop.f32.mrf.mxu0
    %1885 = vdwg.mxu0
    %1886 = vst [vmem:[%s4] sm:$0xff] %v1808
    %1887 = vst [vmem:[%s4 + $0x8] sm:$0xff] %v1813
    %1888 = vst [vmem:[%s4 + $0x10] sm:$0xff] %v1818
    %1889 = vst [vmem:[%s4 + $0x18] sm:$0xff] %v1823
    %1890 = vst [vmem:[%s4 + $0x20] sm:$0xff] %v1828
    %1891 = vst [vmem:[%s4 + $0x28] sm:$0xff] %v1833
    %1892 = vst [vmem:[%s4 + $0x30] sm:$0xff] %v1838
    %1893 = vst [vmem:[%s4 + $0x38] sm:$0xff] %v1843
    %1894 = vst [vmem:[%s4 + $0x40] sm:$0xff] %v1848
    %1895 = vst [vmem:[%s4 + $0x48] sm:$0xff] %v1853
    %1896 = vst [vmem:[%s4 + $0x50] sm:$0xff] %v1858
    %1897 = vst [vmem:[%s4 + $0x58] sm:$0xff] %v1863
    %1898 = vst [vmem:[%s4 + $0x60] sm:$0xff] %v1868
    %1899 = vst [vmem:[%s4 + $0x68] sm:$0xff] %v1873
    %1900 = vst [vmem:[%s4 + $0x70] sm:$0xff] %v1878
    %1901 = vst [vmem:[%s4 + $0x78] sm:$0xff] %v1883
    // Predicated region
    $region22: #{gcn_forward_pallas.1} parent=1 // pred_check
      _
    $region23: #{gcn_forward_pallas.1} parent=1 // pred_check_branch
      %1903 = sbr.rel (0) target = $region25
    $region24: #{gcn_forward_pallas.1} parent=1 // pred_region
      _
    $region25: #{gcn_forward_pallas.1} parent=1 // pred_fallthru
      _
    // Predicated region
    $region26: #{gcn_forward_pallas.1} parent=1 // pred_check
      _
    $region27: #{gcn_forward_pallas.1} parent=1 // pred_check_branch
      %1905 = sbr.rel (0) target = $region29
    $region28: #{gcn_forward_pallas.1} parent=1 // pred_region
      _
    $region29: #{gcn_forward_pallas.1} parent=1 // pred_fallthru
      _
    %1906 = vsyncpa [#allocation3], 1

</llo_original>
